<compile_context>
chip_gen: v7x
topology: tpu7x:2x2x1
jax: 0.10.0
libtpu: 0.0.40
codegen_flags: <defaults>
</compile_context>

<pallas_src>
import numpy as np
import jax
import jax.numpy as jnp
from jax.experimental import pallas as pl
from jax.experimental.pallas import tpu as pltpu


def _round_up(x, m):
    return ((x + m - 1) // m) * m


def _vmem_budgets():
    """(per-block budget, vmem_limit_bytes) sized to the local TPU generation.
    128 MiB-VMEM parts (v5e/v6e) get 16/64 MiB so bigger blocks amortize the
    per-step DMA/setup overhead; 64 MiB parts (v7x) and unknown chips stay at
    the conservative 8/32 MiB that is known to fit."""
    cap = 0
    try:
        cap = int(pltpu.get_tpu_info().vmem_capacity_bytes)
    except Exception:
        cap = 0
    if cap >= 96 * 1024 * 1024:
        return 16 * 1024 * 1024, 64 * 1024 * 1024
    return 8 * 1024 * 1024, 32 * 1024 * 1024


def _interp_matrix_np(out_size, in_size):
    """Rows of PyTorch trilinear (align_corners=False) 1-D interpolation weights."""
    scale = in_size / out_size
    A = np.zeros((out_size, in_size), dtype=np.float32)
    for d in range(out_size):
        src = scale * (d + 0.5) - 0.5
        if src < 0.0:
            src = 0.0
        i0 = int(np.floor(src))
        i1 = i0 + 1 if (i0 < in_size - 1) else i0
        l1 = src - i0
        A[d, i0] += 1.0 - l1
        A[d, i1] += l1
    return A


def _mt_for_scale(D, H, k):
    """Fused (interior-columns) trilinear upsample matrix for scale k, transposed:
    shape (pad8(Dp*Hp), D*H).  Padded rows are zero.  The conv zero-pad border
    reduces to '+ bias' because every 1-D interpolation row sums to 1
    (align_corners=False) -- do not renormalise."""
    Dp, Hp = D // k, H // k
    A_d = _interp_matrix_np(D, Dp + 2)[:, 1:Dp + 1]      # (D, Dp)
    A_h = _interp_matrix_np(H, Hp + 2)[:, 1:Hp + 1]      # (H, Hp)
    M = np.kron(A_d, A_h)                                # (D*H, Dp*Hp)
    P = Dp * Hp
    Pp = _round_up(max(P, 8), 8)
    MT = np.zeros((Pp, D * H), dtype=np.float32)
    MT[:P, :] = M.T
    return MT, P, Pp


def _build_mtcat(D, H):
    """Row-wise concatenation of the four per-scale upsample matrices, plus one
    all-ones row (selected by the bias column of Q) and seven zero pad rows.
    Pure numpy -> baked as a jit-time constant."""
    blocks, infos, off = [], [], 0
    for k in (64, 32, 16, 8):
        MT, P, Pp = _mt_for_scale(D, H, k)
        blocks.append(MT)
        infos.append((off, P, Pp))
        off += Pp
    extra = np.zeros((8, D * H), dtype=np.float32)
    extra[0, :] = 1.0                                    # bias row (ones)
    blocks.append(extra)
    return np.concatenate(blocks, axis=0), off, infos    # (off+8, D*H)


# ----------------------------- Pallas kernels ------------------------------


def _pool8_kernel(x_ref, o_ref):
    # x_ref: (1, 64, T, 128) bf16    o_ref: (1, T, 128) bf16
    # 8x8 max-pool == elementwise max over the leading window axis.  Max is
    # exact in bf16; jnp.max keeps the per-(8,128)-chunk accumulator in vregs
    # (no carried VMEM round-trip, no extra converts) so the kernel stays at
    # the HBM roofline.
    o_ref[0] = jnp.max(x_ref[0], axis=0)


def _upsample_kernel(q_ref, mt_ref, o_ref):
    # q_ref : (4R, K) bf16  block-diagonal pooled projections + bias column
    # mt_ref: (K, TB) bf16  one D*H column tile of the fused upsample matrix
    # o_ref : (4R, TB) bf16
    # Single MXU stream for all four scales; the conv bias rides along in the
    # contraction (ones row of MT x bias column of Q).
    o_ref[...] = jnp.dot(q_ref[...], mt_ref[...],
                         preferred_element_type=jnp.float32).astype(o_ref.dtype)


# ------------------------------- wrappers ----------------------------------


def _pick_pool_tile(lsub, n_batch, budget_bytes):
    """Sublane-row tile for kernel 1 (input block = (1, 64, t, 128) bf16):
    largest divisor of lsub (multiple of 16, or lsub itself) that fits the
    budget, shrunk if needed so the grid has a few steps to pipeline."""
    cands = sorted({t for t in range(16, lsub + 1, 16) if lsub % t == 0} | {lsub})
    fit = [t for t in cands if 64 * t * 128 * 2 <= budget_bytes] or [cands[0]]
    t = fit[-1]
    while n_batch * (lsub // t) < 8:
        smaller = [c for c in fit if c < t]
        if not smaller:
            break
        t = smaller[-1]
    return t


def _pick_col_tile(DH, k_rows, out_rows, budget_bytes):
    """Lane tile (multiple of 128) for kernel 2's D*H column axis, sized so the
    double-buffered MT tile + output tile stay inside the per-block budget."""
    def step_bytes(t):
        return 2 * (k_rows * t * 2) + 2 * (out_rows * t * 2)   # bf16, 2 buffers
    cands = [t for t in range(128, DH + 1, 128) if DH % t == 0]
    fit = [t for t in cands if step_bytes(t) <= budget_bytes] or [cands[0]]
    good = [t for t in fit if t <= 4096]                       # >4K lanes adds nothing
    return (good or fit)[-1]


def pvp_forward(x, params):
    """x: (N, C, D, H, W) float32 with D % 64 == 0 and H % 64 == 0.
    Returns (N, 4, D, H, W) float32 (bf16-accurate)."""
    N, C, D, H, Wd = x.shape
    assert D % 64 == 0 and H % 64 == 0, "PVP requires D, H divisible by 64"
    Dp8, Hp8 = D // 8, H // 8
    P8 = Dp8 * Hp8
    WC = Wd * C
    DH = D * H
    R = N * Wd
    block_budget, vmem_limit = _vmem_budgets()

    # ---- single window-major re-pack (+ bf16 cast), reused by every scale ----
    # TODO(synk): when W*C >= 128, fuse this repack into kernel 1 via a
    # BlockSpec over the 7-D view; for small W the materialized transpose wins.
    L = WC * P8
    Lp = _round_up(L, 128)
    xr = x.reshape(N, C, Dp8, 8, Hp8, 8, Wd)
    xr = xr.transpose(0, 3, 5, 6, 1, 2, 4)               # (N, 8, 8, W, C, Dp8, Hp8)
    xr = xr.reshape(N, 64, L).astype(jnp.bfloat16)
    if Lp != L:
        xr = jnp.pad(xr, ((0, 0), (0, 0), (0, Lp - L)))
    Lsub = Lp // 128
    xr = xr.reshape(N, 64, Lsub, 128)                    # lane-dense pooled plane

    # ---- Pallas kernel 1: 8x8 max-pool (the only full-input pass), bf16 ----
    tsub = _pick_pool_tile(Lsub, N, block_budget)
    pool8 = pl.pallas_call(
        _pool8_kernel,
        out_shape=jax.ShapeDtypeStruct((N, Lsub, 128), jnp.bfloat16),
        grid=(N, Lsub // tsub),
        in_specs=[pl.BlockSpec((1, 64, tsub, 128), lambda n, j: (n, 0, j, 0))],
        out_specs=pl.BlockSpec((1, tsub, 128), lambda n, j: (n, j, 0)),
        compiler_params=pltpu.CompilerParams(
            dimension_semantics=("parallel", "parallel"),
            vmem_limit_bytes=vmem_limit),
    )(xr)

    # ---- hierarchical 2x2 pools + 1x1x1 convs on the 64x-smaller tensor (XLA) ----
    pool8 = pool8.reshape(N, Lp)[:, :L].reshape(N, Wd, C, Dp8, Hp8)
    pools = {8: pool8}

    def _pool2x2(p):
        n_, w_, c_, d_, h_ = p.shape
        return p.reshape(n_, w_, c_, d_ // 2, 2, h_ // 2, 2).max(axis=(4, 6))

    pools[16] = _pool2x2(pools[8])
    pools[32] = _pool2x2(pools[16])
    pools[64] = _pool2x2(pools[32])

    # ---- fused upsample operands: block-diagonal Q, concatenated constant MT ----
    MTcat_np, Ktot, infos = _build_mtcat(D, H)           # trace-time constant
    K = Ktot + 8
    Q = jnp.zeros((4 * R, K), jnp.float32)
    for s, k in enumerate((64, 32, 16, 8)):
        wk, bk = params[k]
        off, P, _ = infos[s]
        q = jnp.einsum('nwcdh,c->nwdh', pools[k], wk).reshape(R, P)
        Q = Q.at[s * R:(s + 1) * R, off:off + P].set(q)
        Q = Q.at[s * R:(s + 1) * R, Ktot].set(bk[0])     # bias via ones row of MT
    Q = Q.astype(jnp.bfloat16)
    MTcat = jnp.asarray(MTcat_np, dtype=jnp.bfloat16)

    # ---- Pallas kernel 2: one MXU stream, D*H column-tiled, bf16 writeback ----
    # TODO(synk): for very large D*H switch to separable (A_h then A_d)
    # upsampling -- the dense kron operand grows as (D*H)^2/k^2 and would
    # pressure v7x's 64 MiB VMEM even with the budgeted column tile.
    TB = _pick_col_tile(DH, K, 4 * R, block_budget)
    out = pl.pallas_call(
        _upsample_kernel,
        out_shape=jax.ShapeDtypeStruct((4 * R, DH), jnp.bfloat16),
        grid=(DH // TB,),
        in_specs=[
            # resident operand: constant index_map, fetched once across the grid
            pl.BlockSpec((4 * R, K), lambda c: (0, 0)),
            pl.BlockSpec((K, TB), lambda c: (0, c)),
        ],
        out_specs=pl.BlockSpec((4 * R, TB), lambda c: (0, c)),
        compiler_params=pltpu.CompilerParams(
            dimension_semantics=("parallel",),
            vmem_limit_bytes=vmem_limit),
    )(Q, MTcat)

    # (4, N*W, D*H) bf16 -> (N, 4, D, H, W) f32.  W=4 < 128 lanes makes a direct
    # in-kernel layout store lane-masked, so the transpose stays in XLA but now
    # reads bf16 (half the bytes); the f32 convert fuses into the same pass.
    out = out.reshape(4, N, Wd, D, H).transpose(1, 0, 3, 4, 2)
    return out.astype(jnp.float32)


def init_pvp_params(in_ch, key):
    """Deterministic synthetic Conv3d(in_ch, 1, 1x1x1) weights/biases per scale."""
    params = {}
    for i, k in enumerate((64, 32, 16, 8)):
        kw, kb = jax.random.split(jax.random.fold_in(key, i))
        w = jax.random.normal(kw, (in_ch,), jnp.float32) * 0.2
        b = jax.random.normal(kb, (1,), jnp.float32) * 0.1
        params[k] = (w, b)
    return params


def pvp_reference(x, params):
    """Pure-JAX f32 reference of the same forward (validation of the kernel path)."""
    N, C, D, H, Wd = x.shape
    outs = []
    for k in (64, 32, 16, 8):
        Dp, Hp = D // k, H // k
        w, b = params[k]
        pooled = x.reshape(N, C, Dp, k, Hp, k, Wd).max(axis=(3, 5))   # (N,C,Dp,Hp,W)
        proj = jnp.einsum('ncijw,c->nijw', pooled, w) + b[0]
        proj = jnp.pad(proj, ((0, 0), (1, 1), (1, 1), (0, 0)),
                       constant_values=float(b[0]))                   # conv zero-pad -> bias
        A_d = jnp.asarray(_interp_matrix_np(D, Dp + 2))
        A_h = jnp.asarray(_interp_matrix_np(H, Hp + 2))
        up = jnp.einsum('di,hj,nijw->ndhw', A_d, A_h, proj)
        outs.append(up)
    return jnp.stack(outs, axis=1)


if __name__ == "__main__":
    key = jax.random.PRNGKey(0)
    kx, kp = jax.random.split(key)

    # smallest shapes consistent with MaxPool3d(kernel=(64,64,1)): D = H = 64
    N, C, D, H, Wd = 2, 4, 64, 64, 4
    x = jax.random.normal(kx, (N, C, D, H, Wd), jnp.float32)
    params = init_pvp_params(C, kp)

    fwd = jax.jit(pvp_forward)
    out = jax.block_until_ready(fwd(x, params))
    assert out.shape == (N, 4, D, H, Wd), out.shape

    ref = pvp_reference(x, params)
    np.testing.assert_allclose(np.asarray(out), np.asarray(ref), rtol=5e-2, atol=5e-2)

    print("KERNEL_OK")
</pallas_src>

<mosaic_0001>
module attributes {stable_mosaic.version = 11 : i64} {
  func.func @_pool8_kernel(%arg0: i32, %arg1: i32, %arg2: memref<1x64x8x128xbf16, #tpu.memory_space<vmem>>, %arg3: memref<1x8x128xbf16, #tpu.memory_space<vmem>>) attributes {dimension_semantics = [#tpu.dimension_semantics<parallel>, #tpu.dimension_semantics<parallel>], iteration_bounds = array<i64: 2, 1>, scalar_prefetch = 0 : i64, scratch_operands = 0 : i64, tpu.core_type = #tpu.core_type<tc>, window_params = [{transform_indices = @transform_0, window_bounds = array<i64: 1, 64, 8, 128>}, {transform_indices = @transform_1, window_bounds = array<i64: 1, 8, 128>}]} {
    %c0 = arith.constant 0 : index
    %c0_0 = arith.constant 0 : index
    %c0_1 = arith.constant 0 : index
    %c0_2 = arith.constant 0 : index
    %0 = vector.load %arg2[%c0, %c0_0, %c0_1, %c0_2] : memref<1x64x8x128xbf16, #tpu.memory_space<vmem>>, vector<1x64x8x128xbf16>
    %1 = vector.shape_cast %0 : vector<1x64x8x128xbf16> to vector<64x8x128xbf16>
    %cst = arith.constant dense<0xFF80> : vector<8x128xbf16>
    %2 = vector.multi_reduction <maximumf>, %1, %cst [0] : vector<64x8x128xbf16> to vector<8x128xbf16>
    %c0_3 = arith.constant 0 : index
    %c0_4 = arith.constant 0 : index
    %c0_5 = arith.constant 0 : index
    %3 = vector.load %arg3[%c0_3, %c0_4, %c0_5] : memref<1x8x128xbf16, #tpu.memory_space<vmem>>, vector<1x8x128xbf16>
    %4 = vector.shape_cast %3 : vector<1x8x128xbf16> to vector<8x128xbf16>
    %5 = vector.shape_cast %2 : vector<8x128xbf16> to vector<1x8x128xbf16>
    tpu.vector_store %arg3[%c0_3, %c0_4, %c0_5], %5 {strides = array<i32>} : memref<1x8x128xbf16, #tpu.memory_space<vmem>>, vector<1x8x128xbf16>,
    return
  }
  func.func @transform_0(%arg0: i32, %arg1: i32) -> (i32, i32, i32, i32) {
    %c0_i32 = arith.constant 0 : i32
    %c0_i32_0 = arith.constant 0 : i32
    %c0_i32_1 = arith.constant 0 : i32
    return %arg0, %c0_i32, %arg1, %c0_i32_0 : i32, i32, i32, i32
  }
  func.func @transform_1(%arg0: i32, %arg1: i32) -> (i32, i32, i32) {
    %c0_i32 = arith.constant 0 : i32
    %c0_i32_0 = arith.constant 0 : i32
    return %arg0, %arg1, %c0_i32 : i32, i32, i32
  }
}

module attributes {stable_mosaic.version = 11 : i64} {
  func.func @_upsample_kernel(%arg0: i32, %arg1: memref<32x104xbf16, #tpu.memory_space<vmem>>, %arg2: memref<104x4096xbf16, #tpu.memory_space<vmem>>, %arg3: memref<32x4096xbf16, #tpu.memory_space<vmem>>) attributes {dimension_semantics = [#tpu.dimension_semantics<parallel>], iteration_bounds = array<i64: 1>, scalar_prefetch = 0 : i64, scratch_operands = 0 : i64, tpu.core_type = #tpu.core_type<tc>, window_params = [{pipeline_mode = #tpu.pipeline_mode<synchronous>, transform_indices = @transform_0, window_bounds = array<i64: 32, 104>}, {transform_indices = @transform_1, window_bounds = array<i64: 104, 4096>}, {transform_indices = @transform_2, window_bounds = array<i64: 32, 4096>}]} {
    %c0 = arith.constant 0 : index
    %c0_0 = arith.constant 0 : index
    %0 = vector.load %arg1[%c0, %c0_0] : memref<32x104xbf16, #tpu.memory_space<vmem>>, vector<32x104xbf16>
    %c0_1 = arith.constant 0 : index
    %c0_2 = arith.constant 0 : index
    %1 = vector.load %arg2[%c0_1, %c0_2] : memref<104x4096xbf16, #tpu.memory_space<vmem>>, vector<104x4096xbf16>
    %cst = arith.constant dense<0.000000e+00> : vector<32x4096xf32>
    %2 = tpu.matmul %0, %1, %cst {dimension_numbers = #tpu.dot_dimension_numbers<[1], [0], [0], [1], [0, 0, 1, 1], [], []>} : vector<32x104xbf16>, vector<104x4096xbf16>, vector<32x4096xf32> -> vector<32x4096xf32>
    %3 = arith.truncf %2 : vector<32x4096xf32> to vector<32x4096xbf16>
    %c0_3 = arith.constant 0 : index
    %c0_4 = arith.constant 0 : index
    %4 = vector.load %arg3[%c0_3, %c0_4] : memref<32x4096xbf16, #tpu.memory_space<vmem>>, vector<32x4096xbf16>
    tpu.vector_store %arg3[%c0_3, %c0_4], %3 {strides = array<i32>} : memref<32x4096xbf16, #tpu.memory_space<vmem>>, vector<32x4096xbf16>,
    return
  }
  func.func @transform_0(%arg0: i32) -> (i32, i32) {
    %c0_i32 = arith.constant 0 : i32
    %c0_i32_0 = arith.constant 0 : i32
    %c0_i32_1 = arith.constant 0 : i32
    return %c0_i32, %c0_i32_0 : i32, i32
  }
  func.func @transform_1(%arg0: i32) -> (i32, i32) {
    %c0_i32 = arith.constant 0 : i32
    %c0_i32_0 = arith.constant 0 : i32
    return %c0_i32, %arg0 : i32, i32
  }
  func.func @transform_2(%arg0: i32) -> (i32, i32) {
    %c0_i32 = arith.constant 0 : i32
    %c0_i32_0 = arith.constant 0 : i32
    return %c0_i32, %arg0 : i32, i32
  }
}

</mosaic_0001>

<llo_original>
// kernel: pvp_forward.2
$region0: #{pvp_forward.2}
  #allocation0 [shape = 'u32[]', space=smem, size = 0x4, offset = 0x4, fixed_abs, tag = 'smem constant byte address 0x4 - core index']
  #allocation1 [shape = 'u32[144,128]{1,0:T(1,128)}', space=vmem, size = 0x12000, scoped, tag = 'internal scratch']
  %s0 = inlined_call_operand.vmem [shape: bf16[2,64,8,128], index: 0, kind: input, shape index: {}]
  %s1 = inlined_call_operand.vmem [shape: bf16[2,8,128], index: 1, kind: output, shape index: {}]
  %s2 = sld [smem:[#allocation0]]
  $region37: #{pvp_forward.2} parent=0
    _
  %s4 = ssub.s32 1, %s2
  %s5 = scalar_select 0, %s4, %s2
  loop: start=0, step=1, limit=4
  $region2: #{pvp_forward.2} parent=0 // loop_pre_header
    _
  $region3: #{pvp_forward.2} parent=0 // loop_header
    %s7 = sphi 0, %s11
    %p8 = scmp.ge.s32.totalorder %s7, 4
    %s14 = sphi 0, %s26
    %s15 = sphi 0, %s22
    %s16 = sphi 0, %s14
    %s17 = sphi 0, %s15
    %s18 = sphi 0, %s16
    %s19 = sphi 0, %s17
    %s31 = sphi 0, %s33
    %s34 = sphi 0, %s31
    %s35 = sphi 0, %s34
    %s51 = sphi 0, %s35
    %s59 = sphi 0, %s61
    %s62 = sphi 0, %s59
    %s63 = sphi 0, %s62
    %s79 = sphi 0, %s63
  $region4: #{pvp_forward.2} parent=0 // loop_header_branch
    %10 = sbr.rel (%p8) target = $region8
  $region5: #{pvp_forward.2} parent=0 // loop_body
    %s12 = ssub.s32 %s7, 1
    %s13 = ssub.s32 %s7, 2
    %s20 = sadd.s32 1, %s15
    %p21 = scmp.ge.s32.totalorder %s20, 1
    %s22 = scalar_select %p21, 0, %s20
    %s23 = sadd.s32 1, %s14
    %s24 = scalar_select %p21, %s23, %s14
    %p25 = scmp.ge.s32.totalorder %s24, 2
    %s26 = scalar_select %p25, 0, %s24
    %s27 = ssub.s32 %s14, %s26
    %s28 = ssub.s32 %s15, %s22
    %s29 = sor.u32 %s27, %s28
    %p30 = scmp.eq.s32.totalorder %s29, 0
    %s32 = sadd.s32 %s31, 1
    %s33 = scalar_select %p30, %s31, %s32
    %p36 = pneg %p30
    %p37 = scmp.eq.s32.totalorder %s7, 1
    %p38 = por %p36, %p37
    %p39 = scmp.ne.s32.totalorder %s31, %s34
    %p40 = scmp.eq.s32.totalorder %s7, 0
    %p41 = por %p39, %p40
    %p42 = scmp.ne.s32.totalorder %s31, %s34
    %p43 = scmp.eq.s32.totalorder %s12, 1
    %p44 = por %p42, %p43
    %p45 = scmp.ne.s32.totalorder %s34, %s35
    %p46 = scmp.eq.s32.totalorder %s12, 0
    %p47 = por %p45, %p46
    %p48 = scmp.ne.s32.totalorder %s34, %s35
    %p49 = scmp.eq.s32.totalorder %s13, 1
    %p50 = por %p48, %p49
    %p52 = scmp.ne.s32.totalorder %s35, %s51
    %p53 = scmp.eq.s32.totalorder %s13, 0
    %p54 = por %p52, %p53
    %s55 = ssub.s32 %s14, %s26
    %s56 = ssub.s32 %s15, %s22
    %s57 = sor.u32 %s55, %s56
    %p58 = scmp.eq.s32.totalorder %s57, 0
    %s60 = sadd.s32 %s59, 1
    %s61 = scalar_select %p58, %s59, %s60
    %p64 = pneg %p58
    %p65 = scmp.eq.s32.totalorder %s7, 1
    %p66 = por %p64, %p65
    %p67 = scmp.ne.s32.totalorder %s59, %s62
    %p68 = scmp.eq.s32.totalorder %s7, 0
    %p69 = por %p67, %p68
    %p70 = scmp.ne.s32.totalorder %s59, %s62
    %p71 = scmp.eq.s32.totalorder %s12, 1
    %p72 = por %p70, %p71
    %p73 = scmp.ne.s32.totalorder %s62, %s63
    %p74 = scmp.eq.s32.totalorder %s12, 0
    %p75 = por %p73, %p74
    %p76 = scmp.ne.s32.totalorder %s62, %s63
    %p77 = scmp.eq.s32.totalorder %s13, 1
    %p78 = por %p76, %p77
    %p80 = scmp.ne.s32.totalorder %s63, %s79
    %p81 = scmp.eq.s32.totalorder %s13, 0
    %p82 = por %p80, %p81
    %p83 = scmp.le.s32.totalorder 1, %s7
    %p84 = scmp.lt.s32.totalorder %s7, 3
    %p85 = pnand %p83, %p84
    %p86 = pneg %p85
    // Predicated region
    $region9: #{pvp_forward.2} parent=5 // pred_check
      _
    $region10: #{pvp_forward.2} parent=5 // pred_check_branch
      %88 = sbr.rel (%p85) target = $region12
    $region11: #{pvp_forward.2} parent=5 // pred_region
      %s89 = ssub.s32 %s7, 1
    $region12: #{pvp_forward.2} parent=5 // pred_fallthru
      _
    %p90 = scmp.lt.s32.totalorder %s7, 2
    // Predicated region
    $region13: #{pvp_forward.2} parent=5 // pred_check
      %p91 = pneg %p90
    $region14: #{pvp_forward.2} parent=5 // pred_check_branch
      %93 = sbr.rel (%p91) target = $region16
    $region15: #{pvp_forward.2} parent=5 // pred_region
      // Predicated region
      $region17: #{pvp_forward.2} parent=15 // pred_check
        %p94 = pneg %p41
      $region18: #{pvp_forward.2} parent=15 // pred_check_branch
        %96 = sbr.rel (%p94) target = $region20
      $region19: #{pvp_forward.2} parent=15 // pred_region
        %p97 = scmp.lt.s32.totalorder %s14, 1
        %s98 = scalar_select %p97, %s14, 1
        %p99 = scmp.lt.s32.totalorder %s15, 0
        %s100 = scalar_select %p99, %s15, 0
        %s101 = smul.addr %s98, 64
        %s102 = sadd.s32 %s100, %s101
        %s103 = smul.addr %s102, 4
        %s104 = scalar_lea.vmem %s0, %s103
      $region20: #{pvp_forward.2} parent=15 // pred_fallthru
        _
    $region16: #{pvp_forward.2} parent=5 // pred_fallthru
      _
    %p105 = scmp.le.s32.totalorder 1, %s7
    %p106 = scmp.lt.s32.totalorder %s7, 3
    %p107 = pnand %p105, %p106
    %p108 = pneg %p107
    // Predicated region
    $region21: #{pvp_forward.2} parent=5 // pred_check
      _
    $region22: #{pvp_forward.2} parent=5 // pred_check_branch
      %110 = sbr.rel (%p107) target = $region24
    $region23: #{pvp_forward.2} parent=5 // pred_region
      %s111 = ssub.s32 %s7, 1
      %p112 = scmp.lt.s32.totalorder %s16, 1
      %s113 = scalar_select %p112, %s16, 1
      %p114 = scmp.lt.s32.totalorder %s17, 0
      %s115 = scalar_select %p114, %s17, 0
      %s116 = smul.addr %s113, 64
      %s117 = sadd.s32 %s115, %s116
      %s118 = smul.addr %s117, 4
      %s119 = scalar_lea.vmem %s0, %s118
      %p120 = pneg %p47
      %p121 = pneg %p44
      %p122 = pneg %p75
      %p123 = pneg %p72
      %p124 = scmp.lt.s32.totalorder %s16, 1
      %s125 = scalar_select %p124, %s16, 1
      %p126 = scmp.lt.s32.totalorder %s17, 0
      %s127 = scalar_select %p126, %s17, 0
      %s128 = sadd.s32 %s127, %s125
      %s129 = smul.addr %s128, 4
      %s130 = scalar_lea.vmem %s1, %s129
      %p131 = scmp.lt.s32.totalorder %s16, 1
      %s132 = scalar_select %p131, %s16, 1
      %p133 = scmp.lt.s32.totalorder %s17, 0
      %s134 = scalar_select %p133, %s17, 0
      %s135 = smul.addr %s132, 64
      %s136 = sadd.s32 %s134, %s135
      %s137 = smul.addr %s136, 4
      %s138 = scalar_lea.vmem %s0, %s137
      %p139 = scmp.lt.s32.totalorder %s16, 1
      %s140 = scalar_select %p139, %s16, 1
      %p141 = scmp.lt.s32.totalorder %s17, 0
      %s142 = scalar_select %p141, %s17, 0
      %s143 = sadd.s32 %s142, %s140
      %s144 = smul.addr %s143, 4
      %s145 = scalar_lea.vmem %s1, %s144
      %v147 = vld [vmem:[%s138] sm:$0xf]
      %v148 = vld [vmem:[%s138 + $0x4] sm:$0xf]
      %v149 = vld [vmem:[%s138 + $0x8] sm:$0xf]
      %v150 = vld [vmem:[%s138 + $0xc] sm:$0xf]
      %v151 = vld [vmem:[%s138 + $0x10] sm:$0xf]
      %v152 = vld [vmem:[%s138 + $0x14] sm:$0xf]
      %v153 = vld [vmem:[%s138 + $0x18] sm:$0xf]
      %v154 = vld [vmem:[%s138 + $0x1c] sm:$0xf]
      %v155 = vld [vmem:[%s138 + $0x20] sm:$0xf]
      %v156 = vld [vmem:[%s138 + $0x24] sm:$0xf]
      %v157 = vld [vmem:[%s138 + $0x28] sm:$0xf]
      %v158 = vld [vmem:[%s138 + $0x2c] sm:$0xf]
      %v159 = vld [vmem:[%s138 + $0x30] sm:$0xf]
      %v160 = vld [vmem:[%s138 + $0x34] sm:$0xf]
      %v161 = vld [vmem:[%s138 + $0x38] sm:$0xf]
      %v162 = vld [vmem:[%s138 + $0x3c] sm:$0xf]
      %v163 = vld [vmem:[%s138 + $0x40] sm:$0xf]
      %v164 = vld [vmem:[%s138 + $0x44] sm:$0xf]
      %v165 = vld [vmem:[%s138 + $0x48] sm:$0xf]
      %v166 = vld [vmem:[%s138 + $0x4c] sm:$0xf]
      %v167 = vld [vmem:[%s138 + $0x50] sm:$0xf]
      %v168 = vld [vmem:[%s138 + $0x54] sm:$0xf]
      %v169 = vld [vmem:[%s138 + $0x58] sm:$0xf]
      %v170 = vld [vmem:[%s138 + $0x5c] sm:$0xf]
      %v171 = vld [vmem:[%s138 + $0x60] sm:$0xf]
      %v172 = vld [vmem:[%s138 + $0x64] sm:$0xf]
      %v173 = vld [vmem:[%s138 + $0x68] sm:$0xf]
      %v174 = vld [vmem:[%s138 + $0x6c] sm:$0xf]
      %v175 = vld [vmem:[%s138 + $0x70] sm:$0xf]
      %v176 = vld [vmem:[%s138 + $0x74] sm:$0xf]
      %v177 = vld [vmem:[%s138 + $0x78] sm:$0xf]
      %v178 = vld [vmem:[%s138 + $0x7c] sm:$0xf]
      %v179 = vld [vmem:[%s138 + $0x80] sm:$0xf]
      %v180 = vld [vmem:[%s138 + $0x84] sm:$0xf]
      %v181 = vld [vmem:[%s138 + $0x88] sm:$0xf]
      %v182 = vld [vmem:[%s138 + $0x8c] sm:$0xf]
      %v183 = vld [vmem:[%s138 + $0x90] sm:$0xf]
      %v184 = vld [vmem:[%s138 + $0x94] sm:$0xf]
      %v185 = vld [vmem:[%s138 + $0x98] sm:$0xf]
      %v186 = vld [vmem:[%s138 + $0x9c] sm:$0xf]
      %v187 = vld [vmem:[%s138 + $0xa0] sm:$0xf]
      %v188 = vld [vmem:[%s138 + $0xa4] sm:$0xf]
      %v189 = vld [vmem:[%s138 + $0xa8] sm:$0xf]
      %v190 = vld [vmem:[%s138 + $0xac] sm:$0xf]
      %v191 = vld [vmem:[%s138 + $0xb0] sm:$0xf]
      %v192 = vld [vmem:[%s138 + $0xb4] sm:$0xf]
      %v193 = vld [vmem:[%s138 + $0xb8] sm:$0xf]
      %v194 = vld [vmem:[%s138 + $0xbc] sm:$0xf]
      %v195 = vld [vmem:[%s138 + $0xc0] sm:$0xf]
      %v196 = vld [vmem:[%s138 + $0xc4] sm:$0xf]
      %v197 = vld [vmem:[%s138 + $0xc8] sm:$0xf]
      %v198 = vld [vmem:[%s138 + $0xcc] sm:$0xf]
      %v199 = vld [vmem:[%s138 + $0xd0] sm:$0xf]
      %v200 = vld [vmem:[%s138 + $0xd4] sm:$0xf]
      %v201 = vld [vmem:[%s138 + $0xd8] sm:$0xf]
      %v202 = vld [vmem:[%s138 + $0xdc] sm:$0xf]
      %v203 = vld [vmem:[%s138 + $0xe0] sm:$0xf]
      %v204 = vld [vmem:[%s138 + $0xe4] sm:$0xf]
      %v205 = vld [vmem:[%s138 + $0xe8] sm:$0xf]
      %v206 = vld [vmem:[%s138 + $0xec] sm:$0xf]
      %v207 = vld [vmem:[%s138 + $0xf0] sm:$0xf]
      %v208 = vld [vmem:[%s138 + $0xf4] sm:$0xf]
      %v209 = vld [vmem:[%s138 + $0xf8] sm:$0xf]
      %v210 = vld [vmem:[%s138 + $0xfc] sm:$0xf]
      %vm211 = vcmask 1043456
      %v214 = vsel %vm211, %v147, 4286644096
      %v217 = vsel %vm211, %v148, 4286644096
      %v220 = vsel %vm211, %v149, 4286644096
      %v223 = vsel %vm211, %v150, 4286644096
      %v226 = vsel %vm211, %v151, 4286644096
      %v228 = vmax.bf16 %v214, %v226
      %v230 = vsel %vm211, %v152, 4286644096
      %v232 = vmax.bf16 %v217, %v230
      %v234 = vsel %vm211, %v153, 4286644096
      %v236 = vmax.bf16 %v220, %v234
      %v238 = vsel %vm211, %v154, 4286644096
      %v240 = vmax.bf16 %v223, %v238
      %v242 = vsel %vm211, %v155, 4286644096
      %v244 = vmax.bf16 %v228, %v242
      %v246 = vsel %vm211, %v156, 4286644096
      %v248 = vmax.bf16 %v232, %v246
      %v250 = vsel %vm211, %v157, 4286644096
      %v252 = vmax.bf16 %v236, %v250
      %v254 = vsel %vm211, %v158, 4286644096
      %v256 = vmax.bf16 %v240, %v254
      %v258 = vsel %vm211, %v159, 4286644096
      %v260 = vmax.bf16 %v244, %v258
      %v262 = vsel %vm211, %v160, 4286644096
      %v264 = vmax.bf16 %v248, %v262
      %v266 = vsel %vm211, %v161, 4286644096
      %v268 = vmax.bf16 %v252, %v266
      %v270 = vsel %vm211, %v162, 4286644096
      %v272 = vmax.bf16 %v256, %v270
      %v274 = vsel %vm211, %v163, 4286644096
      %v276 = vmax.bf16 %v260, %v274
      %v278 = vsel %vm211, %v164, 4286644096
      %v280 = vmax.bf16 %v264, %v278
      %v282 = vsel %vm211, %v165, 4286644096
      %v284 = vmax.bf16 %v268, %v282
      %v286 = vsel %vm211, %v166, 4286644096
      %v288 = vmax.bf16 %v272, %v286
      %v290 = vsel %vm211, %v167, 4286644096
      %v292 = vmax.bf16 %v276, %v290
      %v294 = vsel %vm211, %v168, 4286644096
      %v296 = vmax.bf16 %v280, %v294
      %v298 = vsel %vm211, %v169, 4286644096
      %v300 = vmax.bf16 %v284, %v298
      %v302 = vsel %vm211, %v170, 4286644096
      %v304 = vmax.bf16 %v288, %v302
      %v306 = vsel %vm211, %v171, 4286644096
      %v308 = vmax.bf16 %v292, %v306
      %v310 = vsel %vm211, %v172, 4286644096
      %v312 = vmax.bf16 %v296, %v310
      %v314 = vsel %vm211, %v173, 4286644096
      %v316 = vmax.bf16 %v300, %v314
      %v318 = vsel %vm211, %v174, 4286644096
      %v320 = vmax.bf16 %v304, %v318
      %v322 = vsel %vm211, %v175, 4286644096
      %v324 = vmax.bf16 %v308, %v322
      %v326 = vsel %vm211, %v176, 4286644096
      %v328 = vmax.bf16 %v312, %v326
      %v330 = vsel %vm211, %v177, 4286644096
      %v332 = vmax.bf16 %v316, %v330
      %v334 = vsel %vm211, %v178, 4286644096
      %v336 = vmax.bf16 %v320, %v334
      %v338 = vsel %vm211, %v179, 4286644096
      %v340 = vmax.bf16 %v324, %v338
      %v342 = vsel %vm211, %v180, 4286644096
      %v344 = vmax.bf16 %v328, %v342
      %v346 = vsel %vm211, %v181, 4286644096
      %v348 = vmax.bf16 %v332, %v346
      %v350 = vsel %vm211, %v182, 4286644096
      %v352 = vmax.bf16 %v336, %v350
      %v354 = vsel %vm211, %v183, 4286644096
      %v356 = vmax.bf16 %v340, %v354
      %v358 = vsel %vm211, %v184, 4286644096
      %v360 = vmax.bf16 %v344, %v358
      %v362 = vsel %vm211, %v185, 4286644096
      %v364 = vmax.bf16 %v348, %v362
      %v366 = vsel %vm211, %v186, 4286644096
      %v368 = vmax.bf16 %v352, %v366
      %v370 = vsel %vm211, %v187, 4286644096
      %v372 = vmax.bf16 %v356, %v370
      %v374 = vsel %vm211, %v188, 4286644096
      %v376 = vmax.bf16 %v360, %v374
      %v378 = vsel %vm211, %v189, 4286644096
      %v380 = vmax.bf16 %v364, %v378
      %v382 = vsel %vm211, %v190, 4286644096
      %v384 = vmax.bf16 %v368, %v382
      %v386 = vsel %vm211, %v191, 4286644096
      %v388 = vmax.bf16 %v372, %v386
      %v390 = vsel %vm211, %v192, 4286644096
      %v392 = vmax.bf16 %v376, %v390
      %v394 = vsel %vm211, %v193, 4286644096
      %v396 = vmax.bf16 %v380, %v394
      %v398 = vsel %vm211, %v194, 4286644096
      %v400 = vmax.bf16 %v384, %v398
      %v402 = vsel %vm211, %v195, 4286644096
      %v404 = vmax.bf16 %v388, %v402
      %v406 = vsel %vm211, %v196, 4286644096
      %v408 = vmax.bf16 %v392, %v406
      %v410 = vsel %vm211, %v197, 4286644096
      %v412 = vmax.bf16 %v396, %v410
      %v414 = vsel %vm211, %v198, 4286644096
      %v416 = vmax.bf16 %v400, %v414
      %v418 = vsel %vm211, %v199, 4286644096
      %v420 = vmax.bf16 %v404, %v418
      %v422 = vsel %vm211, %v200, 4286644096
      %v424 = vmax.bf16 %v408, %v422
      %v426 = vsel %vm211, %v201, 4286644096
      %v428 = vmax.bf16 %v412, %v426
      %v430 = vsel %vm211, %v202, 4286644096
      %v432 = vmax.bf16 %v416, %v430
      %v434 = vsel %vm211, %v203, 4286644096
      %v436 = vmax.bf16 %v420, %v434
      %v438 = vsel %vm211, %v204, 4286644096
      %v440 = vmax.bf16 %v424, %v438
      %v442 = vsel %vm211, %v205, 4286644096
      %v444 = vmax.bf16 %v428, %v442
      %v446 = vsel %vm211, %v206, 4286644096
      %v448 = vmax.bf16 %v432, %v446
      %v450 = vsel %vm211, %v207, 4286644096
      %v452 = vmax.bf16 %v436, %v450
      %v454 = vsel %vm211, %v208, 4286644096
      %v456 = vmax.bf16 %v440, %v454
      %v458 = vsel %vm211, %v209, 4286644096
      %v460 = vmax.bf16 %v444, %v458
      %v462 = vsel %vm211, %v210, 4286644096
      %v464 = vmax.bf16 %v448, %v462
      %v465 = vmax.bf16 %v452, %v456
      %v466 = vmax.bf16 %v460, %v464
      %v467 = vmax.bf16 %v465, %v466
      %468 = vst [vmem:[%s145] sm:$0xf] %v467
      %p469 = scmp.lt.s32.totalorder %s16, 1
      %s470 = scalar_select %p469, %s16, 1
      %p471 = scmp.lt.s32.totalorder %s17, 0
      %s472 = scalar_select %p471, %s17, 0
      %s473 = sadd.s32 %s472, %s470
      %s474 = smul.addr %s473, 4
      %s475 = scalar_lea.vmem %s1, %s474
      // Predicated region
      $region25: #{pvp_forward.2} parent=23 // pred_check
        %p476 = pneg %p72
      $region26: #{pvp_forward.2} parent=23 // pred_check_branch
        %478 = sbr.rel (%p476) target = $region28
      $region27: #{pvp_forward.2} parent=23 // pred_region
        _
      $region28: #{pvp_forward.2} parent=23 // pred_fallthru
        _
    $region24: #{pvp_forward.2} parent=5 // pred_fallthru
      _
    %p479 = scmp.le.s32.totalorder 2, %s7
    // Predicated region
    $region29: #{pvp_forward.2} parent=5 // pred_check
      %p480 = pneg %p479
    $region30: #{pvp_forward.2} parent=5 // pred_check_branch
      %482 = sbr.rel (%p480) target = $region32
    $region31: #{pvp_forward.2} parent=5 // pred_region
      %s483 = ssub.s32 %s7, 2
      // Predicated region
      $region33: #{pvp_forward.2} parent=31 // pred_check
        %p484 = pneg %p78
      $region34: #{pvp_forward.2} parent=31 // pred_check_branch
        %486 = sbr.rel (%p484) target = $region36
      $region35: #{pvp_forward.2} parent=31 // pred_region
        %p487 = scmp.lt.s32.totalorder %s18, 1
        %s488 = scalar_select %p487, %s18, 1
        %p489 = scmp.lt.s32.totalorder %s19, 0
        %s490 = scalar_select %p489, %s19, 0
        %s491 = sadd.s32 %s490, %s488
        %s492 = smul.addr %s491, 4
        %s493 = scalar_lea.vmem %s1, %s492
      $region36: #{pvp_forward.2} parent=31 // pred_fallthru
        _
    $region32: #{pvp_forward.2} parent=5 // pred_fallthru
      _
  $region6: #{pvp_forward.2} parent=0 // loop_footer
    %s11 = sadd.s32 1, %s7
  $region7: #{pvp_forward.2} parent=0 // loop_footer_branch
    %6 = sbr.rel target = $region3
  $region8: #{pvp_forward.2} parent=0 // loop_exit
    _

// kernel: pvp_forward.3
$region0: #{pvp_forward.3}
  #allocation0 [shape = 'u32[]', space=smem, size = 0x4, offset = 0x4, fixed_abs, tag = 'smem constant byte address 0x4 - core index']
  #allocation1 [shape = 'u32[144,128]{1,0:T(1,128)}', space=vmem, size = 0x12000, scoped, tag = 'internal scratch']
  %s0 = inlined_call_operand.vmem [shape: bf16[32,104], index: 0, kind: input, shape index: {}]
  %s1 = inlined_call_operand.vmem [shape: bf16[104,4096], index: 1, kind: input, shape index: {}]
  %s2 = inlined_call_operand.vmem [shape: bf16[32,4096], index: 2, kind: output, shape index: {}]
  %s3 = sld [smem:[#allocation0]]
  $region18: #{pvp_forward.3} parent=0
    _
  %s5 = ssub.s32 1, %s3
  %s6 = scalar_select 0, %s5, %s3
  // Predicated region
  $region2: #{pvp_forward.3} parent=0 // pred_check
    _
  $region3: #{pvp_forward.3} parent=0 // pred_check_branch
    %8 = sbr.rel (0) target = $region5
  $region4: #{pvp_forward.3} parent=0 // pred_region
    _
  $region5: #{pvp_forward.3} parent=0 // pred_fallthru
    _
  // Predicated region
  $region6: #{pvp_forward.3} parent=0 // pred_check
    _
  $region7: #{pvp_forward.3} parent=0 // pred_check_branch
    %10 = sbr.rel (0) target = $region9
  $region8: #{pvp_forward.3} parent=0 // pred_region
    _
  $region9: #{pvp_forward.3} parent=0 // pred_fallthru
    _
  %v12 = vld [vmem:[%s0] sm:$0xf]
  %v13 = vld [vmem:[%s0 + $0x4] sm:$0xf]
  %v14 = vld [vmem:[%s0 + $0x8] sm:$0xf]
  %v15 = vld [vmem:[%s0 + $0xc] sm:$0xf]
  %v16 = vld [vmem:[%s1] sm:$0xff]
  %v17 = vld [vmem:[%s1 + $0x8] sm:$0xff]
  %v18 = vld [vmem:[%s1 + $0x10] sm:$0xff]
  %v19 = vld [vmem:[%s1 + $0x18] sm:$0xff]
  %v20 = vld [vmem:[%s1 + $0x20] sm:$0xff]
  %v21 = vld [vmem:[%s1 + $0x28] sm:$0xff]
  %v22 = vld [vmem:[%s1 + $0x30] sm:$0xff]
  %v23 = vld [vmem:[%s1 + $0x38] sm:$0xff]
  %v24 = vld [vmem:[%s1 + $0x40] sm:$0xff]
  %v25 = vld [vmem:[%s1 + $0x48] sm:$0xff]
  %v26 = vld [vmem:[%s1 + $0x50] sm:$0xff]
  %v27 = vld [vmem:[%s1 + $0x58] sm:$0xff]
  %v28 = vld [vmem:[%s1 + $0x60] sm:$0xff]
  %v29 = vld [vmem:[%s1 + $0x68] sm:$0xff]
  %v30 = vld [vmem:[%s1 + $0x70] sm:$0xff]
  %v31 = vld [vmem:[%s1 + $0x78] sm:$0xff]
  %v32 = vld [vmem:[%s1 + $0x80] sm:$0xff]
  %v33 = vld [vmem:[%s1 + $0x88] sm:$0xff]
  %v34 = vld [vmem:[%s1 + $0x90] sm:$0xff]
  %v35 = vld [vmem:[%s1 + $0x98] sm:$0xff]
  %v36 = vld [vmem:[%s1 + $0xa0] sm:$0xff]
  %v37 = vld [vmem:[%s1 + $0xa8] sm:$0xff]
  %v38 = vld [vmem:[%s1 + $0xb0] sm:$0xff]
  %v39 = vld [vmem:[%s1 + $0xb8] sm:$0xff]
  %v40 = vld [vmem:[%s1 + $0xc0] sm:$0xff]
  %v41 = vld [vmem:[%s1 + $0xc8] sm:$0xff]
  %v42 = vld [vmem:[%s1 + $0xd0] sm:$0xff]
  %v43 = vld [vmem:[%s1 + $0xd8] sm:$0xff]
  %v44 = vld [vmem:[%s1 + $0xe0] sm:$0xff]
  %v45 = vld [vmem:[%s1 + $0xe8] sm:$0xff]
  %v46 = vld [vmem:[%s1 + $0xf0] sm:$0xff]
  %v47 = vld [vmem:[%s1 + $0xf8] sm:$0xff]
  %v48 = vld [vmem:[%s1 + $0x100] sm:$0xff]
  %v49 = vld [vmem:[%s1 + $0x108] sm:$0xff]
  %v50 = vld [vmem:[%s1 + $0x110] sm:$0xff]
  %v51 = vld [vmem:[%s1 + $0x118] sm:$0xff]
  %v52 = vld [vmem:[%s1 + $0x120] sm:$0xff]
  %v53 = vld [vmem:[%s1 + $0x128] sm:$0xff]
  %v54 = vld [vmem:[%s1 + $0x130] sm:$0xff]
  %v55 = vld [vmem:[%s1 + $0x138] sm:$0xff]
  %v56 = vld [vmem:[%s1 + $0x140] sm:$0xff]
  %v57 = vld [vmem:[%s1 + $0x148] sm:$0xff]
  %v58 = vld [vmem:[%s1 + $0x150] sm:$0xff]
  %v59 = vld [vmem:[%s1 + $0x158] sm:$0xff]
  %v60 = vld [vmem:[%s1 + $0x160] sm:$0xff]
  %v61 = vld [vmem:[%s1 + $0x168] sm:$0xff]
  %v62 = vld [vmem:[%s1 + $0x170] sm:$0xff]
  %v63 = vld [vmem:[%s1 + $0x178] sm:$0xff]
  %v64 = vld [vmem:[%s1 + $0x180] sm:$0xff]
  %v65 = vld [vmem:[%s1 + $0x188] sm:$0xff]
  %v66 = vld [vmem:[%s1 + $0x190] sm:$0xff]
  %v67 = vld [vmem:[%s1 + $0x198] sm:$0xff]
  %v68 = vld [vmem:[%s1 + $0x1a0] sm:$0xff]
  %v69 = vld [vmem:[%s1 + $0x1a8] sm:$0xff]
  %v70 = vld [vmem:[%s1 + $0x1b0] sm:$0xff]
  %v71 = vld [vmem:[%s1 + $0x1b8] sm:$0xff]
  %v72 = vld [vmem:[%s1 + $0x1c0] sm:$0xff]
  %v73 = vld [vmem:[%s1 + $0x1c8] sm:$0xff]
  %v74 = vld [vmem:[%s1 + $0x1d0] sm:$0xff]
  %v75 = vld [vmem:[%s1 + $0x1d8] sm:$0xff]
  %v76 = vld [vmem:[%s1 + $0x1e0] sm:$0xff]
  %v77 = vld [vmem:[%s1 + $0x1e8] sm:$0xff]
  %v78 = vld [vmem:[%s1 + $0x1f0] sm:$0xff]
  %v79 = vld [vmem:[%s1 + $0x1f8] sm:$0xff]
  %v80 = vld [vmem:[%s1 + $0x200] sm:$0xff]
  %v81 = vld [vmem:[%s1 + $0x208] sm:$0xff]
  %v82 = vld [vmem:[%s1 + $0x210] sm:$0xff]
  %v83 = vld [vmem:[%s1 + $0x218] sm:$0xff]
  %v84 = vld [vmem:[%s1 + $0x220] sm:$0xff]
  %v85 = vld [vmem:[%s1 + $0x228] sm:$0xff]
  %v86 = vld [vmem:[%s1 + $0x230] sm:$0xff]
  %v87 = vld [vmem:[%s1 + $0x238] sm:$0xff]
  %v88 = vld [vmem:[%s1 + $0x240] sm:$0xff]
  %v89 = vld [vmem:[%s1 + $0x248] sm:$0xff]
  %v90 = vld [vmem:[%s1 + $0x250] sm:$0xff]
  %v91 = vld [vmem:[%s1 + $0x258] sm:$0xff]
  %v92 = vld [vmem:[%s1 + $0x260] sm:$0xff]
  %v93 = vld [vmem:[%s1 + $0x268] sm:$0xff]
  %v94 = vld [vmem:[%s1 + $0x270] sm:$0xff]
  %v95 = vld [vmem:[%s1 + $0x278] sm:$0xff]
  %v96 = vld [vmem:[%s1 + $0x280] sm:$0xff]
  %v97 = vld [vmem:[%s1 + $0x288] sm:$0xff]
  %v98 = vld [vmem:[%s1 + $0x290] sm:$0xff]
  %v99 = vld [vmem:[%s1 + $0x298] sm:$0xff]
  %v100 = vld [vmem:[%s1 + $0x2a0] sm:$0xff]
  %v101 = vld [vmem:[%s1 + $0x2a8] sm:$0xff]
  %v102 = vld [vmem:[%s1 + $0x2b0] sm:$0xff]
  %v103 = vld [vmem:[%s1 + $0x2b8] sm:$0xff]
  %v104 = vld [vmem:[%s1 + $0x2c0] sm:$0xff]
  %v105 = vld [vmem:[%s1 + $0x2c8] sm:$0xff]
  %v106 = vld [vmem:[%s1 + $0x2d0] sm:$0xff]
  %v107 = vld [vmem:[%s1 + $0x2d8] sm:$0xff]
  %v108 = vld [vmem:[%s1 + $0x2e0] sm:$0xff]
  %v109 = vld [vmem:[%s1 + $0x2e8] sm:$0xff]
  %v110 = vld [vmem:[%s1 + $0x2f0] sm:$0xff]
  %v111 = vld [vmem:[%s1 + $0x2f8] sm:$0xff]
  %v112 = vld [vmem:[%s1 + $0x300] sm:$0xff]
  %v113 = vld [vmem:[%s1 + $0x308] sm:$0xff]
  %v114 = vld [vmem:[%s1 + $0x310] sm:$0xff]
  %v115 = vld [vmem:[%s1 + $0x318] sm:$0xff]
  %v116 = vld [vmem:[%s1 + $0x320] sm:$0xff]
  %v117 = vld [vmem:[%s1 + $0x328] sm:$0xff]
  %v118 = vld [vmem:[%s1 + $0x330] sm:$0xff]
  %v119 = vld [vmem:[%s1 + $0x338] sm:$0xff]
  %v120 = vld [vmem:[%s1 + $0x340] sm:$0xff]
  %v121 = vld [vmem:[%s1 + $0x348] sm:$0xff]
  %v122 = vld [vmem:[%s1 + $0x350] sm:$0xff]
  %v123 = vld [vmem:[%s1 + $0x358] sm:$0xff]
  %v124 = vld [vmem:[%s1 + $0x360] sm:$0xff]
  %v125 = vld [vmem:[%s1 + $0x368] sm:$0xff]
  %v126 = vld [vmem:[%s1 + $0x370] sm:$0xff]
  %v127 = vld [vmem:[%s1 + $0x378] sm:$0xff]
  %v128 = vld [vmem:[%s1 + $0x380] sm:$0xff]
  %v129 = vld [vmem:[%s1 + $0x388] sm:$0xff]
  %v130 = vld [vmem:[%s1 + $0x390] sm:$0xff]
  %v131 = vld [vmem:[%s1 + $0x398] sm:$0xff]
  %v132 = vld [vmem:[%s1 + $0x3a0] sm:$0xff]
  %v133 = vld [vmem:[%s1 + $0x3a8] sm:$0xff]
  %v134 = vld [vmem:[%s1 + $0x3b0] sm:$0xff]
  %v135 = vld [vmem:[%s1 + $0x3b8] sm:$0xff]
  %v136 = vld [vmem:[%s1 + $0x3c0] sm:$0xff]
  %v137 = vld [vmem:[%s1 + $0x3c8] sm:$0xff]
  %v138 = vld [vmem:[%s1 + $0x3d0] sm:$0xff]
  %v139 = vld [vmem:[%s1 + $0x3d8] sm:$0xff]
  %v140 = vld [vmem:[%s1 + $0x3e0] sm:$0xff]
  %v141 = vld [vmem:[%s1 + $0x3e8] sm:$0xff]
  %v142 = vld [vmem:[%s1 + $0x3f0] sm:$0xff]
  %v143 = vld [vmem:[%s1 + $0x3f8] sm:$0xff]
  %v144 = vld [vmem:[%s1 + $0x400] sm:$0xff]
  %v145 = vld [vmem:[%s1 + $0x408] sm:$0xff]
  %v146 = vld [vmem:[%s1 + $0x410] sm:$0xff]
  %v147 = vld [vmem:[%s1 + $0x418] sm:$0xff]
  %v148 = vld [vmem:[%s1 + $0x420] sm:$0xff]
  %v149 = vld [vmem:[%s1 + $0x428] sm:$0xff]
  %v150 = vld [vmem:[%s1 + $0x430] sm:$0xff]
  %v151 = vld [vmem:[%s1 + $0x438] sm:$0xff]
  %v152 = vld [vmem:[%s1 + $0x440] sm:$0xff]
  %v153 = vld [vmem:[%s1 + $0x448] sm:$0xff]
  %v154 = vld [vmem:[%s1 + $0x450] sm:$0xff]
  %v155 = vld [vmem:[%s1 + $0x458] sm:$0xff]
  %v156 = vld [vmem:[%s1 + $0x460] sm:$0xff]
  %v157 = vld [vmem:[%s1 + $0x468] sm:$0xff]
  %v158 = vld [vmem:[%s1 + $0x470] sm:$0xff]
  %v159 = vld [vmem:[%s1 + $0x478] sm:$0xff]
  %v160 = vld [vmem:[%s1 + $0x480] sm:$0xff]
  %v161 = vld [vmem:[%s1 + $0x488] sm:$0xff]
  %v162 = vld [vmem:[%s1 + $0x490] sm:$0xff]
  %v163 = vld [vmem:[%s1 + $0x498] sm:$0xff]
  %v164 = vld [vmem:[%s1 + $0x4a0] sm:$0xff]
  %v165 = vld [vmem:[%s1 + $0x4a8] sm:$0xff]
  %v166 = vld [vmem:[%s1 + $0x4b0] sm:$0xff]
  %v167 = vld [vmem:[%s1 + $0x4b8] sm:$0xff]
  %v168 = vld [vmem:[%s1 + $0x4c0] sm:$0xff]
  %v169 = vld [vmem:[%s1 + $0x4c8] sm:$0xff]
  %v170 = vld [vmem:[%s1 + $0x4d0] sm:$0xff]
  %v171 = vld [vmem:[%s1 + $0x4d8] sm:$0xff]
  %v172 = vld [vmem:[%s1 + $0x4e0] sm:$0xff]
  %v173 = vld [vmem:[%s1 + $0x4e8] sm:$0xff]
  %v174 = vld [vmem:[%s1 + $0x4f0] sm:$0xff]
  %v175 = vld [vmem:[%s1 + $0x4f8] sm:$0xff]
  %v176 = vld [vmem:[%s1 + $0x500] sm:$0xff]
  %v177 = vld [vmem:[%s1 + $0x508] sm:$0xff]
  %v178 = vld [vmem:[%s1 + $0x510] sm:$0xff]
  %v179 = vld [vmem:[%s1 + $0x518] sm:$0xff]
  %v180 = vld [vmem:[%s1 + $0x520] sm:$0xff]
  %v181 = vld [vmem:[%s1 + $0x528] sm:$0xff]
  %v182 = vld [vmem:[%s1 + $0x530] sm:$0xff]
  %v183 = vld [vmem:[%s1 + $0x538] sm:$0xff]
  %v184 = vld [vmem:[%s1 + $0x540] sm:$0xff]
  %v185 = vld [vmem:[%s1 + $0x548] sm:$0xff]
  %v186 = vld [vmem:[%s1 + $0x550] sm:$0xff]
  %v187 = vld [vmem:[%s1 + $0x558] sm:$0xff]
  %v188 = vld [vmem:[%s1 + $0x560] sm:$0xff]
  %v189 = vld [vmem:[%s1 + $0x568] sm:$0xff]
  %v190 = vld [vmem:[%s1 + $0x570] sm:$0xff]
  %v191 = vld [vmem:[%s1 + $0x578] sm:$0xff]
  %v192 = vld [vmem:[%s1 + $0x580] sm:$0xff]
  %v193 = vld [vmem:[%s1 + $0x588] sm:$0xff]
  %v194 = vld [vmem:[%s1 + $0x590] sm:$0xff]
  %v195 = vld [vmem:[%s1 + $0x598] sm:$0xff]
  %v196 = vld [vmem:[%s1 + $0x5a0] sm:$0xff]
  %v197 = vld [vmem:[%s1 + $0x5a8] sm:$0xff]
  %v198 = vld [vmem:[%s1 + $0x5b0] sm:$0xff]
  %v199 = vld [vmem:[%s1 + $0x5b8] sm:$0xff]
  %v200 = vld [vmem:[%s1 + $0x5c0] sm:$0xff]
  %v201 = vld [vmem:[%s1 + $0x5c8] sm:$0xff]
  %v202 = vld [vmem:[%s1 + $0x5d0] sm:$0xff]
  %v203 = vld [vmem:[%s1 + $0x5d8] sm:$0xff]
  %v204 = vld [vmem:[%s1 + $0x5e0] sm:$0xff]
  %v205 = vld [vmem:[%s1 + $0x5e8] sm:$0xff]
  %v206 = vld [vmem:[%s1 + $0x5f0] sm:$0xff]
  %v207 = vld [vmem:[%s1 + $0x5f8] sm:$0xff]
  %v208 = vld [vmem:[%s1 + $0x600] sm:$0xff]
  %v209 = vld [vmem:[%s1 + $0x608] sm:$0xff]
  %v210 = vld [vmem:[%s1 + $0x610] sm:$0xff]
  %v211 = vld [vmem:[%s1 + $0x618] sm:$0xff]
  %v212 = vld [vmem:[%s1 + $0x620] sm:$0xff]
  %v213 = vld [vmem:[%s1 + $0x628] sm:$0xff]
  %v214 = vld [vmem:[%s1 + $0x630] sm:$0xff]
  %v215 = vld [vmem:[%s1 + $0x638] sm:$0xff]
  %v216 = vld [vmem:[%s1 + $0x640] sm:$0xff]
  %v217 = vld [vmem:[%s1 + $0x648] sm:$0xff]
  %v218 = vld [vmem:[%s1 + $0x650] sm:$0xff]
  %v219 = vld [vmem:[%s1 + $0x658] sm:$0xff]
  %v220 = vld [vmem:[%s1 + $0x660] sm:$0xff]
  %v221 = vld [vmem:[%s1 + $0x668] sm:$0xff]
  %v222 = vld [vmem:[%s1 + $0x670] sm:$0xff]
  %v223 = vld [vmem:[%s1 + $0x678] sm:$0xff]
  %v228 = vunpack.c.l.b16 %v12
  %v229 = vunpack.c.l.b16 %v13
  %v230 = vunpack.c.l.b16 %v14
  %v231 = vunpack.c.l.b16 %v15
  %v232 = vpack.c.b16 %v229, %v228
  %v233 = vpack.c.b16 %v231, %v230
  %v442 = vunpack.c.l.b16 %v16
  %v443 = vunpack.c.h.b16 %v16
  %v444 = vunpack.c.l.b16 %v17
  %v445 = vunpack.c.h.b16 %v17
  %v446 = vunpack.c.l.b16 %v18
  %v447 = vunpack.c.h.b16 %v18
  %v448 = vunpack.c.l.b16 %v19
  %v449 = vunpack.c.h.b16 %v19
  %v450 = vunpack.c.l.b16 %v20
  %v451 = vunpack.c.h.b16 %v20
  %v452 = vunpack.c.l.b16 %v21
  %v453 = vunpack.c.h.b16 %v21
  %v454 = vunpack.c.l.b16 %v22
  %v455 = vunpack.c.h.b16 %v22
  %v456 = vunpack.c.l.b16 %v23
  %v457 = vunpack.c.h.b16 %v23
  %v458 = vunpack.c.l.b16 %v24
  %v459 = vunpack.c.h.b16 %v24
  %v460 = vunpack.c.l.b16 %v25
  %v461 = vunpack.c.h.b16 %v25
  %v462 = vunpack.c.l.b16 %v26
  %v463 = vunpack.c.h.b16 %v26
  %v464 = vunpack.c.l.b16 %v27
  %v465 = vunpack.c.h.b16 %v27
  %v466 = vunpack.c.l.b16 %v28
  %v467 = vunpack.c.h.b16 %v28
  %v468 = vunpack.c.l.b16 %v29
  %v469 = vunpack.c.h.b16 %v29
  %v470 = vunpack.c.l.b16 %v30
  %v471 = vunpack.c.h.b16 %v30
  %v472 = vunpack.c.l.b16 %v31
  %v473 = vunpack.c.h.b16 %v31
  %v474 = vunpack.c.l.b16 %v32
  %v475 = vunpack.c.h.b16 %v32
  %v476 = vunpack.c.l.b16 %v33
  %v477 = vunpack.c.h.b16 %v33
  %v478 = vunpack.c.l.b16 %v34
  %v479 = vunpack.c.h.b16 %v34
  %v480 = vunpack.c.l.b16 %v35
  %v481 = vunpack.c.h.b16 %v35
  %v482 = vunpack.c.l.b16 %v36
  %v483 = vunpack.c.h.b16 %v36
  %v484 = vunpack.c.l.b16 %v37
  %v485 = vunpack.c.h.b16 %v37
  %v486 = vunpack.c.l.b16 %v38
  %v487 = vunpack.c.h.b16 %v38
  %v488 = vunpack.c.l.b16 %v39
  %v489 = vunpack.c.h.b16 %v39
  %v490 = vunpack.c.l.b16 %v40
  %v491 = vunpack.c.h.b16 %v40
  %v492 = vunpack.c.l.b16 %v41
  %v493 = vunpack.c.h.b16 %v41
  %v494 = vunpack.c.l.b16 %v42
  %v495 = vunpack.c.h.b16 %v42
  %v496 = vunpack.c.l.b16 %v43
  %v497 = vunpack.c.h.b16 %v43
  %v498 = vunpack.c.l.b16 %v44
  %v499 = vunpack.c.h.b16 %v44
  %v500 = vunpack.c.l.b16 %v45
  %v501 = vunpack.c.h.b16 %v45
  %v502 = vunpack.c.l.b16 %v46
  %v503 = vunpack.c.h.b16 %v46
  %v504 = vunpack.c.l.b16 %v47
  %v505 = vunpack.c.h.b16 %v47
  %v506 = vunpack.c.l.b16 %v48
  %v507 = vunpack.c.h.b16 %v48
  %v508 = vunpack.c.l.b16 %v49
  %v509 = vunpack.c.h.b16 %v49
  %v510 = vunpack.c.l.b16 %v50
  %v511 = vunpack.c.h.b16 %v50
  %v512 = vunpack.c.l.b16 %v51
  %v513 = vunpack.c.h.b16 %v51
  %v514 = vunpack.c.l.b16 %v52
  %v515 = vunpack.c.h.b16 %v52
  %v516 = vunpack.c.l.b16 %v53
  %v517 = vunpack.c.h.b16 %v53
  %v518 = vunpack.c.l.b16 %v54
  %v519 = vunpack.c.h.b16 %v54
  %v520 = vunpack.c.l.b16 %v55
  %v521 = vunpack.c.h.b16 %v55
  %v522 = vunpack.c.l.b16 %v56
  %v523 = vunpack.c.h.b16 %v56
  %v524 = vunpack.c.l.b16 %v57
  %v525 = vunpack.c.h.b16 %v57
  %v526 = vunpack.c.l.b16 %v58
  %v527 = vunpack.c.h.b16 %v58
  %v528 = vunpack.c.l.b16 %v59
  %v529 = vunpack.c.h.b16 %v59
  %v530 = vunpack.c.l.b16 %v60
  %v531 = vunpack.c.h.b16 %v60
  %v532 = vunpack.c.l.b16 %v61
  %v533 = vunpack.c.h.b16 %v61
  %v534 = vunpack.c.l.b16 %v62
  %v535 = vunpack.c.h.b16 %v62
  %v536 = vunpack.c.l.b16 %v63
  %v537 = vunpack.c.h.b16 %v63
  %v538 = vunpack.c.l.b16 %v64
  %v539 = vunpack.c.h.b16 %v64
  %v540 = vunpack.c.l.b16 %v65
  %v541 = vunpack.c.h.b16 %v65
  %v542 = vunpack.c.l.b16 %v66
  %v543 = vunpack.c.h.b16 %v66
  %v544 = vunpack.c.l.b16 %v67
  %v545 = vunpack.c.h.b16 %v67
  %v546 = vunpack.c.l.b16 %v68
  %v547 = vunpack.c.h.b16 %v68
  %v548 = vunpack.c.l.b16 %v69
  %v549 = vunpack.c.h.b16 %v69
  %v550 = vunpack.c.l.b16 %v70
  %v551 = vunpack.c.h.b16 %v70
  %v552 = vunpack.c.l.b16 %v71
  %v553 = vunpack.c.h.b16 %v71
  %v554 = vunpack.c.l.b16 %v72
  %v555 = vunpack.c.h.b16 %v72
  %v556 = vunpack.c.l.b16 %v73
  %v557 = vunpack.c.h.b16 %v73
  %v558 = vunpack.c.l.b16 %v74
  %v559 = vunpack.c.h.b16 %v74
  %v560 = vunpack.c.l.b16 %v75
  %v561 = vunpack.c.h.b16 %v75
  %v562 = vunpack.c.l.b16 %v76
  %v563 = vunpack.c.h.b16 %v76
  %v564 = vunpack.c.l.b16 %v77
  %v565 = vunpack.c.h.b16 %v77
  %v566 = vunpack.c.l.b16 %v78
  %v567 = vunpack.c.h.b16 %v78
  %v568 = vunpack.c.l.b16 %v79
  %v569 = vunpack.c.h.b16 %v79
  %v570 = vunpack.c.l.b16 %v80
  %v571 = vunpack.c.h.b16 %v80
  %v572 = vunpack.c.l.b16 %v81
  %v573 = vunpack.c.h.b16 %v81
  %v574 = vunpack.c.l.b16 %v82
  %v575 = vunpack.c.h.b16 %v82
  %v576 = vunpack.c.l.b16 %v83
  %v577 = vunpack.c.h.b16 %v83
  %v578 = vunpack.c.l.b16 %v84
  %v579 = vunpack.c.h.b16 %v84
  %v580 = vunpack.c.l.b16 %v85
  %v581 = vunpack.c.h.b16 %v85
  %v582 = vunpack.c.l.b16 %v86
  %v583 = vunpack.c.h.b16 %v86
  %v584 = vunpack.c.l.b16 %v87
  %v585 = vunpack.c.h.b16 %v87
  %v586 = vunpack.c.l.b16 %v88
  %v587 = vunpack.c.h.b16 %v88
  %v588 = vunpack.c.l.b16 %v89
  %v589 = vunpack.c.h.b16 %v89
  %v590 = vunpack.c.l.b16 %v90
  %v591 = vunpack.c.h.b16 %v90
  %v592 = vunpack.c.l.b16 %v91
  %v593 = vunpack.c.h.b16 %v91
  %v594 = vunpack.c.l.b16 %v92
  %v595 = vunpack.c.h.b16 %v92
  %v596 = vunpack.c.l.b16 %v93
  %v597 = vunpack.c.h.b16 %v93
  %v598 = vunpack.c.l.b16 %v94
  %v599 = vunpack.c.h.b16 %v94
  %v600 = vunpack.c.l.b16 %v95
  %v601 = vunpack.c.h.b16 %v95
  %v602 = vunpack.c.l.b16 %v96
  %v603 = vunpack.c.h.b16 %v96
  %v604 = vunpack.c.l.b16 %v97
  %v605 = vunpack.c.h.b16 %v97
  %v606 = vunpack.c.l.b16 %v98
  %v607 = vunpack.c.h.b16 %v98
  %v608 = vunpack.c.l.b16 %v99
  %v609 = vunpack.c.h.b16 %v99
  %v610 = vunpack.c.l.b16 %v100
  %v611 = vunpack.c.h.b16 %v100
  %v612 = vunpack.c.l.b16 %v101
  %v613 = vunpack.c.h.b16 %v101
  %v614 = vunpack.c.l.b16 %v102
  %v615 = vunpack.c.h.b16 %v102
  %v616 = vunpack.c.l.b16 %v103
  %v617 = vunpack.c.h.b16 %v103
  %v618 = vunpack.c.l.b16 %v104
  %v619 = vunpack.c.h.b16 %v104
  %v620 = vunpack.c.l.b16 %v105
  %v621 = vunpack.c.h.b16 %v105
  %v622 = vunpack.c.l.b16 %v106
  %v623 = vunpack.c.h.b16 %v106
  %v624 = vunpack.c.l.b16 %v107
  %v625 = vunpack.c.h.b16 %v107
  %v626 = vunpack.c.l.b16 %v108
  %v627 = vunpack.c.h.b16 %v108
  %v628 = vunpack.c.l.b16 %v109
  %v629 = vunpack.c.h.b16 %v109
  %v630 = vunpack.c.l.b16 %v110
  %v631 = vunpack.c.h.b16 %v110
  %v632 = vunpack.c.l.b16 %v111
  %v633 = vunpack.c.h.b16 %v111
  %v634 = vunpack.c.l.b16 %v112
  %v635 = vunpack.c.h.b16 %v112
  %v636 = vunpack.c.l.b16 %v113
  %v637 = vunpack.c.h.b16 %v113
  %v638 = vunpack.c.l.b16 %v114
  %v639 = vunpack.c.h.b16 %v114
  %v640 = vunpack.c.l.b16 %v115
  %v641 = vunpack.c.h.b16 %v115
  %v642 = vunpack.c.l.b16 %v116
  %v643 = vunpack.c.h.b16 %v116
  %v644 = vunpack.c.l.b16 %v117
  %v645 = vunpack.c.h.b16 %v117
  %v646 = vunpack.c.l.b16 %v118
  %v647 = vunpack.c.h.b16 %v118
  %v648 = vunpack.c.l.b16 %v119
  %v649 = vunpack.c.h.b16 %v119
  %v650 = vunpack.c.l.b16 %v120
  %v651 = vunpack.c.h.b16 %v120
  %v652 = vunpack.c.l.b16 %v121
  %v653 = vunpack.c.h.b16 %v121
  %v654 = vunpack.c.l.b16 %v122
  %v655 = vunpack.c.h.b16 %v122
  %v656 = vunpack.c.l.b16 %v123
  %v657 = vunpack.c.h.b16 %v123
  %v658 = vunpack.c.l.b16 %v124
  %v659 = vunpack.c.h.b16 %v124
  %v660 = vunpack.c.l.b16 %v125
  %v661 = vunpack.c.h.b16 %v125
  %v662 = vunpack.c.l.b16 %v126
  %v663 = vunpack.c.h.b16 %v126
  %v664 = vunpack.c.l.b16 %v127
  %v665 = vunpack.c.h.b16 %v127
  %v666 = vunpack.c.l.b16 %v128
  %v667 = vunpack.c.h.b16 %v128
  %v668 = vunpack.c.l.b16 %v129
  %v669 = vunpack.c.h.b16 %v129
  %v670 = vunpack.c.l.b16 %v130
  %v671 = vunpack.c.h.b16 %v130
  %v672 = vunpack.c.l.b16 %v131
  %v673 = vunpack.c.h.b16 %v131
  %v674 = vunpack.c.l.b16 %v132
  %v675 = vunpack.c.h.b16 %v132
  %v676 = vunpack.c.l.b16 %v133
  %v677 = vunpack.c.h.b16 %v133
  %v678 = vunpack.c.l.b16 %v134
  %v679 = vunpack.c.h.b16 %v134
  %v680 = vunpack.c.l.b16 %v135
  %v681 = vunpack.c.h.b16 %v135
  %v682 = vunpack.c.l.b16 %v136
  %v683 = vunpack.c.h.b16 %v136
  %v684 = vunpack.c.l.b16 %v137
  %v685 = vunpack.c.h.b16 %v137
  %v686 = vunpack.c.l.b16 %v138
  %v687 = vunpack.c.h.b16 %v138
  %v688 = vunpack.c.l.b16 %v139
  %v689 = vunpack.c.h.b16 %v139
  %v690 = vunpack.c.l.b16 %v140
  %v691 = vunpack.c.h.b16 %v140
  %v692 = vunpack.c.l.b16 %v141
  %v693 = vunpack.c.h.b16 %v141
  %v694 = vunpack.c.l.b16 %v142
  %v695 = vunpack.c.h.b16 %v142
  %v696 = vunpack.c.l.b16 %v143
  %v697 = vunpack.c.h.b16 %v143
  %v698 = vunpack.c.l.b16 %v144
  %v699 = vunpack.c.h.b16 %v144
  %v700 = vunpack.c.l.b16 %v145
  %v701 = vunpack.c.h.b16 %v145
  %v702 = vunpack.c.l.b16 %v146
  %v703 = vunpack.c.h.b16 %v146
  %v704 = vunpack.c.l.b16 %v147
  %v705 = vunpack.c.h.b16 %v147
  %v706 = vunpack.c.l.b16 %v148
  %v707 = vunpack.c.h.b16 %v148
  %v708 = vunpack.c.l.b16 %v149
  %v709 = vunpack.c.h.b16 %v149
  %v710 = vunpack.c.l.b16 %v150
  %v711 = vunpack.c.h.b16 %v150
  %v712 = vunpack.c.l.b16 %v151
  %v713 = vunpack.c.h.b16 %v151
  %v714 = vunpack.c.l.b16 %v152
  %v715 = vunpack.c.h.b16 %v152
  %v716 = vunpack.c.l.b16 %v153
  %v717 = vunpack.c.h.b16 %v153
  %v718 = vunpack.c.l.b16 %v154
  %v719 = vunpack.c.h.b16 %v154
  %v720 = vunpack.c.l.b16 %v155
  %v721 = vunpack.c.h.b16 %v155
  %v722 = vunpack.c.l.b16 %v156
  %v723 = vunpack.c.h.b16 %v156
  %v724 = vunpack.c.l.b16 %v157
  %v725 = vunpack.c.h.b16 %v157
  %v726 = vunpack.c.l.b16 %v158
  %v727 = vunpack.c.h.b16 %v158
  %v728 = vunpack.c.l.b16 %v159
  %v729 = vunpack.c.h.b16 %v159
  %v730 = vunpack.c.l.b16 %v160
  %v731 = vunpack.c.h.b16 %v160
  %v732 = vunpack.c.l.b16 %v161
  %v733 = vunpack.c.h.b16 %v161
  %v734 = vunpack.c.l.b16 %v162
  %v735 = vunpack.c.h.b16 %v162
  %v736 = vunpack.c.l.b16 %v163
  %v737 = vunpack.c.h.b16 %v163
  %v738 = vunpack.c.l.b16 %v164
  %v739 = vunpack.c.h.b16 %v164
  %v740 = vunpack.c.l.b16 %v165
  %v741 = vunpack.c.h.b16 %v165
  %v742 = vunpack.c.l.b16 %v166
  %v743 = vunpack.c.h.b16 %v166
  %v744 = vunpack.c.l.b16 %v167
  %v745 = vunpack.c.h.b16 %v167
  %v746 = vunpack.c.l.b16 %v168
  %v747 = vunpack.c.h.b16 %v168
  %v748 = vunpack.c.l.b16 %v169
  %v749 = vunpack.c.h.b16 %v169
  %v750 = vunpack.c.l.b16 %v170
  %v751 = vunpack.c.h.b16 %v170
  %v752 = vunpack.c.l.b16 %v171
  %v753 = vunpack.c.h.b16 %v171
  %v754 = vunpack.c.l.b16 %v172
  %v755 = vunpack.c.h.b16 %v172
  %v756 = vunpack.c.l.b16 %v173
  %v757 = vunpack.c.h.b16 %v173
  %v758 = vunpack.c.l.b16 %v174
  %v759 = vunpack.c.h.b16 %v174
  %v760 = vunpack.c.l.b16 %v175
  %v761 = vunpack.c.h.b16 %v175
  %v762 = vunpack.c.l.b16 %v176
  %v763 = vunpack.c.h.b16 %v176
  %v764 = vunpack.c.l.b16 %v177
  %v765 = vunpack.c.h.b16 %v177
  %v766 = vunpack.c.l.b16 %v178
  %v767 = vunpack.c.h.b16 %v178
  %v768 = vunpack.c.l.b16 %v179
  %v769 = vunpack.c.h.b16 %v179
  %v770 = vunpack.c.l.b16 %v180
  %v771 = vunpack.c.h.b16 %v180
  %v772 = vunpack.c.l.b16 %v181
  %v773 = vunpack.c.h.b16 %v181
  %v774 = vunpack.c.l.b16 %v182
  %v775 = vunpack.c.h.b16 %v182
  %v776 = vunpack.c.l.b16 %v183
  %v777 = vunpack.c.h.b16 %v183
  %v778 = vunpack.c.l.b16 %v184
  %v779 = vunpack.c.h.b16 %v184
  %v780 = vunpack.c.l.b16 %v185
  %v781 = vunpack.c.h.b16 %v185
  %v782 = vunpack.c.l.b16 %v186
  %v783 = vunpack.c.h.b16 %v186
  %v784 = vunpack.c.l.b16 %v187
  %v785 = vunpack.c.h.b16 %v187
  %v786 = vunpack.c.l.b16 %v188
  %v787 = vunpack.c.h.b16 %v188
  %v788 = vunpack.c.l.b16 %v189
  %v789 = vunpack.c.h.b16 %v189
  %v790 = vunpack.c.l.b16 %v190
  %v791 = vunpack.c.h.b16 %v190
  %v792 = vunpack.c.l.b16 %v191
  %v793 = vunpack.c.h.b16 %v191
  %v794 = vunpack.c.l.b16 %v192
  %v795 = vunpack.c.h.b16 %v192
  %v796 = vunpack.c.l.b16 %v193
  %v797 = vunpack.c.h.b16 %v193
  %v798 = vunpack.c.l.b16 %v194
  %v799 = vunpack.c.h.b16 %v194
  %v800 = vunpack.c.l.b16 %v195
  %v801 = vunpack.c.h.b16 %v195
  %v802 = vunpack.c.l.b16 %v196
  %v803 = vunpack.c.h.b16 %v196
  %v804 = vunpack.c.l.b16 %v197
  %v805 = vunpack.c.h.b16 %v197
  %v806 = vunpack.c.l.b16 %v198
  %v807 = vunpack.c.h.b16 %v198
  %v808 = vunpack.c.l.b16 %v199
  %v809 = vunpack.c.h.b16 %v199
  %v810 = vunpack.c.l.b16 %v200
  %v811 = vunpack.c.h.b16 %v200
  %v812 = vunpack.c.l.b16 %v201
  %v813 = vunpack.c.h.b16 %v201
  %v814 = vunpack.c.l.b16 %v202
  %v815 = vunpack.c.h.b16 %v202
  %v816 = vunpack.c.l.b16 %v203
  %v817 = vunpack.c.h.b16 %v203
  %v818 = vunpack.c.l.b16 %v204
  %v819 = vunpack.c.h.b16 %v204
  %v820 = vunpack.c.l.b16 %v205
  %v821 = vunpack.c.h.b16 %v205
  %v822 = vunpack.c.l.b16 %v206
  %v823 = vunpack.c.h.b16 %v206
  %v824 = vunpack.c.l.b16 %v207
  %v825 = vunpack.c.h.b16 %v207
  %v826 = vunpack.c.l.b16 %v208
  %v827 = vunpack.c.h.b16 %v208
  %v828 = vunpack.c.l.b16 %v209
  %v829 = vunpack.c.h.b16 %v209
  %v830 = vunpack.c.l.b16 %v210
  %v831 = vunpack.c.h.b16 %v210
  %v832 = vunpack.c.l.b16 %v211
  %v833 = vunpack.c.h.b16 %v211
  %v834 = vunpack.c.l.b16 %v212
  %v835 = vunpack.c.h.b16 %v212
  %v836 = vunpack.c.l.b16 %v213
  %v837 = vunpack.c.h.b16 %v213
  %v838 = vunpack.c.l.b16 %v214
  %v839 = vunpack.c.h.b16 %v214
  %v840 = vunpack.c.l.b16 %v215
  %v841 = vunpack.c.h.b16 %v215
  %v842 = vunpack.c.l.b16 %v216
  %v843 = vunpack.c.h.b16 %v216
  %v844 = vunpack.c.l.b16 %v217
  %v845 = vunpack.c.h.b16 %v217
  %v846 = vunpack.c.l.b16 %v218
  %v847 = vunpack.c.h.b16 %v218
  %v848 = vunpack.c.l.b16 %v219
  %v849 = vunpack.c.h.b16 %v219
  %v850 = vunpack.c.l.b16 %v220
  %v851 = vunpack.c.h.b16 %v220
  %v852 = vunpack.c.l.b16 %v221
  %v853 = vunpack.c.h.b16 %v221
  %v854 = vunpack.c.l.b16 %v222
  %v855 = vunpack.c.h.b16 %v222
  %v856 = vunpack.c.l.b16 %v223
  %v857 = vunpack.c.h.b16 %v223
  %v858 = vpack.c.b16 %v474, %v442
  %v859 = vpack.c.b16 %v475, %v443
  %v860 = vpack.c.b16 %v476, %v444
  %v861 = vpack.c.b16 %v477, %v445
  %v862 = vpack.c.b16 %v478, %v446
  %v863 = vpack.c.b16 %v479, %v447
  %v864 = vpack.c.b16 %v480, %v448
  %v865 = vpack.c.b16 %v481, %v449
  %v866 = vpack.c.b16 %v482, %v450
  %v867 = vpack.c.b16 %v483, %v451
  %v868 = vpack.c.b16 %v484, %v452
  %v869 = vpack.c.b16 %v485, %v453
  %v870 = vpack.c.b16 %v486, %v454
  %v871 = vpack.c.b16 %v487, %v455
  %v872 = vpack.c.b16 %v488, %v456
  %v873 = vpack.c.b16 %v489, %v457
  %v874 = vpack.c.b16 %v490, %v458
  %v875 = vpack.c.b16 %v491, %v459
  %v876 = vpack.c.b16 %v492, %v460
  %v877 = vpack.c.b16 %v493, %v461
  %v878 = vpack.c.b16 %v494, %v462
  %v879 = vpack.c.b16 %v495, %v463
  %v880 = vpack.c.b16 %v496, %v464
  %v881 = vpack.c.b16 %v497, %v465
  %v882 = vpack.c.b16 %v498, %v466
  %v883 = vpack.c.b16 %v499, %v467
  %v884 = vpack.c.b16 %v500, %v468
  %v885 = vpack.c.b16 %v501, %v469
  %v886 = vpack.c.b16 %v502, %v470
  %v887 = vpack.c.b16 %v503, %v471
  %v888 = vpack.c.b16 %v504, %v472
  %v889 = vpack.c.b16 %v505, %v473
  %v890 = vpack.c.b16 %v538, %v506
  %v891 = vpack.c.b16 %v539, %v507
  %v892 = vpack.c.b16 %v540, %v508
  %v893 = vpack.c.b16 %v541, %v509
  %v894 = vpack.c.b16 %v542, %v510
  %v895 = vpack.c.b16 %v543, %v511
  %v896 = vpack.c.b16 %v544, %v512
  %v897 = vpack.c.b16 %v545, %v513
  %v898 = vpack.c.b16 %v546, %v514
  %v899 = vpack.c.b16 %v547, %v515
  %v900 = vpack.c.b16 %v548, %v516
  %v901 = vpack.c.b16 %v549, %v517
  %v902 = vpack.c.b16 %v550, %v518
  %v903 = vpack.c.b16 %v551, %v519
  %v904 = vpack.c.b16 %v552, %v520
  %v905 = vpack.c.b16 %v553, %v521
  %v906 = vpack.c.b16 %v554, %v522
  %v907 = vpack.c.b16 %v555, %v523
  %v908 = vpack.c.b16 %v556, %v524
  %v909 = vpack.c.b16 %v557, %v525
  %v910 = vpack.c.b16 %v558, %v526
  %v911 = vpack.c.b16 %v559, %v527
  %v912 = vpack.c.b16 %v560, %v528
  %v913 = vpack.c.b16 %v561, %v529
  %v914 = vpack.c.b16 %v562, %v530
  %v915 = vpack.c.b16 %v563, %v531
  %v916 = vpack.c.b16 %v564, %v532
  %v917 = vpack.c.b16 %v565, %v533
  %v918 = vpack.c.b16 %v566, %v534
  %v919 = vpack.c.b16 %v567, %v535
  %v920 = vpack.c.b16 %v568, %v536
  %v921 = vpack.c.b16 %v569, %v537
  %v922 = vpack.c.b16 %v602, %v570
  %v923 = vpack.c.b16 %v603, %v571
  %v924 = vpack.c.b16 %v604, %v572
  %v925 = vpack.c.b16 %v605, %v573
  %v926 = vpack.c.b16 %v606, %v574
  %v927 = vpack.c.b16 %v607, %v575
  %v928 = vpack.c.b16 %v608, %v576
  %v929 = vpack.c.b16 %v609, %v577
  %v930 = vpack.c.b16 %v610, %v578
  %v931 = vpack.c.b16 %v611, %v579
  %v932 = vpack.c.b16 %v612, %v580
  %v933 = vpack.c.b16 %v613, %v581
  %v934 = vpack.c.b16 %v614, %v582
  %v935 = vpack.c.b16 %v615, %v583
  %v936 = vpack.c.b16 %v616, %v584
  %v937 = vpack.c.b16 %v617, %v585
  %v938 = vpack.c.b16 %v618, %v586
  %v939 = vpack.c.b16 %v619, %v587
  %v940 = vpack.c.b16 %v620, %v588
  %v941 = vpack.c.b16 %v621, %v589
  %v942 = vpack.c.b16 %v622, %v590
  %v943 = vpack.c.b16 %v623, %v591
  %v944 = vpack.c.b16 %v624, %v592
  %v945 = vpack.c.b16 %v625, %v593
  %v946 = vpack.c.b16 %v626, %v594
  %v947 = vpack.c.b16 %v627, %v595
  %v948 = vpack.c.b16 %v628, %v596
  %v949 = vpack.c.b16 %v629, %v597
  %v950 = vpack.c.b16 %v630, %v598
  %v951 = vpack.c.b16 %v631, %v599
  %v952 = vpack.c.b16 %v632, %v600
  %v953 = vpack.c.b16 %v633, %v601
  %v954 = vpack.c.b16 %v666, %v634
  %v955 = vpack.c.b16 %v667, %v635
  %v956 = vpack.c.b16 %v668, %v636
  %v957 = vpack.c.b16 %v669, %v637
  %v958 = vpack.c.b16 %v670, %v638
  %v959 = vpack.c.b16 %v671, %v639
  %v960 = vpack.c.b16 %v672, %v640
  %v961 = vpack.c.b16 %v673, %v641
  %v962 = vpack.c.b16 %v674, %v642
  %v963 = vpack.c.b16 %v675, %v643
  %v964 = vpack.c.b16 %v676, %v644
  %v965 = vpack.c.b16 %v677, %v645
  %v966 = vpack.c.b16 %v678, %v646
  %v967 = vpack.c.b16 %v679, %v647
  %v968 = vpack.c.b16 %v680, %v648
  %v969 = vpack.c.b16 %v681, %v649
  %v970 = vpack.c.b16 %v682, %v650
  %v971 = vpack.c.b16 %v683, %v651
  %v972 = vpack.c.b16 %v684, %v652
  %v973 = vpack.c.b16 %v685, %v653
  %v974 = vpack.c.b16 %v686, %v654
  %v975 = vpack.c.b16 %v687, %v655
  %v976 = vpack.c.b16 %v688, %v656
  %v977 = vpack.c.b16 %v689, %v657
  %v978 = vpack.c.b16 %v690, %v658
  %v979 = vpack.c.b16 %v691, %v659
  %v980 = vpack.c.b16 %v692, %v660
  %v981 = vpack.c.b16 %v693, %v661
  %v982 = vpack.c.b16 %v694, %v662
  %v983 = vpack.c.b16 %v695, %v663
  %v984 = vpack.c.b16 %v696, %v664
  %v985 = vpack.c.b16 %v697, %v665
  %v986 = vpack.c.b16 %v730, %v698
  %v987 = vpack.c.b16 %v731, %v699
  %v988 = vpack.c.b16 %v732, %v700
  %v989 = vpack.c.b16 %v733, %v701
  %v990 = vpack.c.b16 %v734, %v702
  %v991 = vpack.c.b16 %v735, %v703
  %v992 = vpack.c.b16 %v736, %v704
  %v993 = vpack.c.b16 %v737, %v705
  %v994 = vpack.c.b16 %v738, %v706
  %v995 = vpack.c.b16 %v739, %v707
  %v996 = vpack.c.b16 %v740, %v708
  %v997 = vpack.c.b16 %v741, %v709
  %v998 = vpack.c.b16 %v742, %v710
  %v999 = vpack.c.b16 %v743, %v711
  %v1000 = vpack.c.b16 %v744, %v712
  %v1001 = vpack.c.b16 %v745, %v713
  %v1002 = vpack.c.b16 %v746, %v714
  %v1003 = vpack.c.b16 %v747, %v715
  %v1004 = vpack.c.b16 %v748, %v716
  %v1005 = vpack.c.b16 %v749, %v717
  %v1006 = vpack.c.b16 %v750, %v718
  %v1007 = vpack.c.b16 %v751, %v719
  %v1008 = vpack.c.b16 %v752, %v720
  %v1009 = vpack.c.b16 %v753, %v721
  %v1010 = vpack.c.b16 %v754, %v722
  %v1011 = vpack.c.b16 %v755, %v723
  %v1012 = vpack.c.b16 %v756, %v724
  %v1013 = vpack.c.b16 %v757, %v725
  %v1014 = vpack.c.b16 %v758, %v726
  %v1015 = vpack.c.b16 %v759, %v727
  %v1016 = vpack.c.b16 %v760, %v728
  %v1017 = vpack.c.b16 %v761, %v729
  %v1018 = vpack.c.b16 %v794, %v762
  %v1019 = vpack.c.b16 %v795, %v763
  %v1020 = vpack.c.b16 %v796, %v764
  %v1021 = vpack.c.b16 %v797, %v765
  %v1022 = vpack.c.b16 %v798, %v766
  %v1023 = vpack.c.b16 %v799, %v767
  %v1024 = vpack.c.b16 %v800, %v768
  %v1025 = vpack.c.b16 %v801, %v769
  %v1026 = vpack.c.b16 %v802, %v770
  %v1027 = vpack.c.b16 %v803, %v771
  %v1028 = vpack.c.b16 %v804, %v772
  %v1029 = vpack.c.b16 %v805, %v773
  %v1030 = vpack.c.b16 %v806, %v774
  %v1031 = vpack.c.b16 %v807, %v775
  %v1032 = vpack.c.b16 %v808, %v776
  %v1033 = vpack.c.b16 %v809, %v777
  %v1034 = vpack.c.b16 %v810, %v778
  %v1035 = vpack.c.b16 %v811, %v779
  %v1036 = vpack.c.b16 %v812, %v780
  %v1037 = vpack.c.b16 %v813, %v781
  %v1038 = vpack.c.b16 %v814, %v782
  %v1039 = vpack.c.b16 %v815, %v783
  %v1040 = vpack.c.b16 %v816, %v784
  %v1041 = vpack.c.b16 %v817, %v785
  %v1042 = vpack.c.b16 %v818, %v786
  %v1043 = vpack.c.b16 %v819, %v787
  %v1044 = vpack.c.b16 %v820, %v788
  %v1045 = vpack.c.b16 %v821, %v789
  %v1046 = vpack.c.b16 %v822, %v790
  %v1047 = vpack.c.b16 %v823, %v791
  %v1048 = vpack.c.b16 %v824, %v792
  %v1049 = vpack.c.b16 %v825, %v793
  %v1050 = vpack.c.b16 %v826, %v826
  %v1051 = vpack.c.b16 %v827, %v827
  %v1052 = vpack.c.b16 %v828, %v828
  %v1053 = vpack.c.b16 %v829, %v829
  %v1054 = vpack.c.b16 %v830, %v830
  %v1055 = vpack.c.b16 %v831, %v831
  %v1056 = vpack.c.b16 %v832, %v832
  %v1057 = vpack.c.b16 %v833, %v833
  %v1058 = vpack.c.b16 %v834, %v834
  %v1059 = vpack.c.b16 %v835, %v835
  %v1060 = vpack.c.b16 %v836, %v836
  %v1061 = vpack.c.b16 %v837, %v837
  %v1062 = vpack.c.b16 %v838, %v838
  %v1063 = vpack.c.b16 %v839, %v839
  %v1064 = vpack.c.b16 %v840, %v840
  %v1065 = vpack.c.b16 %v841, %v841
  %v1066 = vpack.c.b16 %v842, %v842
  %v1067 = vpack.c.b16 %v843, %v843
  %v1068 = vpack.c.b16 %v844, %v844
  %v1069 = vpack.c.b16 %v845, %v845
  %v1070 = vpack.c.b16 %v846, %v846
  %v1071 = vpack.c.b16 %v847, %v847
  %v1072 = vpack.c.b16 %v848, %v848
  %v1073 = vpack.c.b16 %v849, %v849
  %v1074 = vpack.c.b16 %v850, %v850
  %v1075 = vpack.c.b16 %v851, %v851
  %v1076 = vpack.c.b16 %v852, %v852
  %v1077 = vpack.c.b16 %v853, %v853
  %v1078 = vpack.c.b16 %v854, %v854
  %v1079 = vpack.c.b16 %v855, %v855
  %v1080 = vpack.c.b16 %v856, %v856
  %v1081 = vpack.c.b16 %v857, %v857
  %vm1274 = vcmask 850944
  %v1276 = vsel %vm1274, %v232, 0
  %v1279 = vsel %vm1274, %v233, 0
  %vm1281 = vcmask 1043456
  %v1283 = vsel %vm1281, %v1050, 0
  %v1286 = vsel %vm1281, %v1051, 0
  %v1289 = vsel %vm1281, %v1052, 0
  %v1292 = vsel %vm1281, %v1053, 0
  %v1295 = vsel %vm1281, %v1054, 0
  %v1298 = vsel %vm1281, %v1055, 0
  %v1301 = vsel %vm1281, %v1056, 0
  %v1304 = vsel %vm1281, %v1057, 0
  %v1307 = vsel %vm1281, %v1058, 0
  %v1310 = vsel %vm1281, %v1059, 0
  %v1313 = vsel %vm1281, %v1060, 0
  %v1316 = vsel %vm1281, %v1061, 0
  %v1319 = vsel %vm1281, %v1062, 0
  %v1322 = vsel %vm1281, %v1063, 0
  %v1325 = vsel %vm1281, %v1064, 0
  %v1328 = vsel %vm1281, %v1065, 0
  %v1331 = vsel %vm1281, %v1066, 0
  %v1334 = vsel %vm1281, %v1067, 0
  %v1337 = vsel %vm1281, %v1068, 0
  %v1340 = vsel %vm1281, %v1069, 0
  %v1343 = vsel %vm1281, %v1070, 0
  %v1346 = vsel %vm1281, %v1071, 0
  %v1349 = vsel %vm1281, %v1072, 0
  %v1352 = vsel %vm1281, %v1073, 0
  %v1355 = vsel %vm1281, %v1074, 0
  %v1358 = vsel %vm1281, %v1075, 0
  %v1361 = vsel %vm1281, %v1076, 0
  %v1364 = vsel %vm1281, %v1077, 0
  %v1367 = vsel %vm1281, %v1078, 0
  %v1370 = vsel %vm1281, %v1079, 0
  %v1373 = vsel %vm1281, %v1080, 0
  %v1376 = vsel %vm1281, %v1081, 0
  %1378 = vmatprep.subr.bf16.mxu0 %v859
  %1379 = vmatpush1.bf16.msra.mxu0 %v858
  %1380 = vmatprep.subr.bf16.mxu0 %v891
  %1381 = vmatpush1.bf16.msra.mxu0 %v890
  %1382 = vmatprep.subr.bf16.mxu0 %v923
  %1383 = vmatpush1.bf16.msra.mxu0 %v922
  %1384 = vmatprep.subr.bf16.mxu0 %v955
  %1385 = vmatpush1.bf16.msra.mxu0 %v954
  %1386 = vmatprep.subr.bf16.mxu0 %v987
  %1387 = vmatpush1.bf16.msra.mxu0 %v986
  %1388 = vmatprep.subr.bf16.mxu0 %v1019
  %1389 = vmatpush1.bf16.msra.mxu0 %v1018
  %1390 = vmatprep.subr.bf16.mxu0 %v1286
  %1391 = vmatpush1.bf16.msra.mxu0 %v1283
  %1392 = vmatprep.subr.bf16.mxu0 0
  %1393 = vmatpush1.bf16.msra.mxu0 0
  %1394 = vmatprep.subr.bf16.mxu0 0
  %1395 = vmatpush1.bf16.msra.mxu0 0
  %1396 = vmatprep.subr.bf16.mxu0 0
  %1397 = vmatpush1.bf16.msra.mxu0 0
  %1398 = vmatprep.subr.bf16.mxu0 0
  %1399 = vmatpush1.bf16.msra.mxu0 0
  %1400 = vmatprep.subr.bf16.mxu0 0
  %1401 = vmatpush1.bf16.msra.mxu0 0
  %1402 = vmatprep.subr.bf16.mxu0 0
  %1403 = vmatpush1.bf16.msra.mxu0 0
  %1404 = vmatprep.subr.bf16.mxu0 0
  %1405 = vmatpush1.bf16.msra.mxu0 0
  %1406 = vmatprep.subr.bf16.mxu0 0
  %1407 = vmatpush1.bf16.msra.mxu0 0
  %1408 = vmatprep.subr.bf16.mxu0 0
  %1409 = vmatpush1.bf16.msra.mxu0 0
  %1410 = vmatprep.mubr.bf16.mxu0 0
  %1411 = vmatmul.mubr.bf16.gmra.mrb[0].mxu0 %v1276
  %v1412 = vpop.f32.mrb[0].mxu0
  %v1413 = vadd.f32 0.0, %v1412
  %v1414 = vpop.f32.mrb[0].mxu0
  %v1415 = vadd.f32 0.0, %v1414
  %v1416 = vpop.f32.mrb[0].mxu0
  %v1417 = vadd.f32 0.0, %v1416
  %v1418 = vpop.f32.mrb[0].mxu0
  %v1419 = vadd.f32 0.0, %v1418
  %1420 = vmatprep.mubr.bf16.mxu0 0
  %1421 = vmatmul.mubr.bf16.gmra.mrb[0].mxu0 %v1279
  %v1422 = vpop.f32.mrb[0].mxu0
  %v1423 = vadd.f32 0.0, %v1422
  %v1424 = vpop.f32.mrb[0].mxu0
  %v1425 = vadd.f32 0.0, %v1424
  %v1426 = vpop.f32.mrb[0].mxu0
  %v1427 = vadd.f32 0.0, %v1426
  %v1428 = vpop.f32.mrb[0].mxu0
  %v1429 = vadd.f32 0.0, %v1428
  %1430 = vdwg.mxu0
  %1431 = vmatprep.subr.bf16.mxu0 %v861
  %1432 = vmatpush1.bf16.msra.mxu0 %v860
  %1433 = vmatprep.subr.bf16.mxu0 %v893
  %1434 = vmatpush1.bf16.msra.mxu0 %v892
  %1435 = vmatprep.subr.bf16.mxu0 %v925
  %1436 = vmatpush1.bf16.msra.mxu0 %v924
  %1437 = vmatprep.subr.bf16.mxu0 %v957
  %1438 = vmatpush1.bf16.msra.mxu0 %v956
  %1439 = vmatprep.subr.bf16.mxu0 %v989
  %1440 = vmatpush1.bf16.msra.mxu0 %v988
  %1441 = vmatprep.subr.bf16.mxu0 %v1021
  %1442 = vmatpush1.bf16.msra.mxu0 %v1020
  %1443 = vmatprep.subr.bf16.mxu0 %v1292
  %1444 = vmatpush1.bf16.msra.mxu0 %v1289
  %1445 = vmatprep.subr.bf16.mxu0 0
  %1446 = vmatpush1.bf16.msra.mxu0 0
  %1447 = vmatprep.subr.bf16.mxu0 0
  %1448 = vmatpush1.bf16.msra.mxu0 0
  %1449 = vmatprep.subr.bf16.mxu0 0
  %1450 = vmatpush1.bf16.msra.mxu0 0
  %1451 = vmatprep.subr.bf16.mxu0 0
  %1452 = vmatpush1.bf16.msra.mxu0 0
  %1453 = vmatprep.subr.bf16.mxu0 0
  %1454 = vmatpush1.bf16.msra.mxu0 0
  %1455 = vmatprep.subr.bf16.mxu0 0
  %1456 = vmatpush1.bf16.msra.mxu0 0
  %1457 = vmatprep.subr.bf16.mxu0 0
  %1458 = vmatpush1.bf16.msra.mxu0 0
  %1459 = vmatprep.subr.bf16.mxu0 0
  %1460 = vmatpush1.bf16.msra.mxu0 0
  %1461 = vmatprep.subr.bf16.mxu0 0
  %1462 = vmatpush1.bf16.msra.mxu0 0
  %1463 = vmatprep.mubr.bf16.mxu0 0
  %1464 = vmatmul.mubr.bf16.gmra.mrb[0].mxu0 %v1276
  %v1465 = vpop.f32.mrb[0].mxu0
  %v1466 = vadd.f32 0.0, %v1465
  %v1467 = vpop.f32.mrb[0].mxu0
  %v1468 = vadd.f32 0.0, %v1467
  %v1469 = vpop.f32.mrb[0].mxu0
  %v1470 = vadd.f32 0.0, %v1469
  %v1471 = vpop.f32.mrb[0].mxu0
  %v1472 = vadd.f32 0.0, %v1471
  %1473 = vmatprep.mubr.bf16.mxu0 0
  %1474 = vmatmul.mubr.bf16.gmra.mrb[0].mxu0 %v1279
  %v1475 = vpop.f32.mrb[0].mxu0
  %v1476 = vadd.f32 0.0, %v1475
  %v1477 = vpop.f32.mrb[0].mxu0
  %v1478 = vadd.f32 0.0, %v1477
  %v1479 = vpop.f32.mrb[0].mxu0
  %v1480 = vadd.f32 0.0, %v1479
  %v1481 = vpop.f32.mrb[0].mxu0
  %v1482 = vadd.f32 0.0, %v1481
  %1483 = vdwg.mxu0
  %1484 = vmatprep.subr.bf16.mxu0 %v863
  %1485 = vmatpush1.bf16.msra.mxu0 %v862
  %1486 = vmatprep.subr.bf16.mxu0 %v895
  %1487 = vmatpush1.bf16.msra.mxu0 %v894
  %1488 = vmatprep.subr.bf16.mxu0 %v927
  %1489 = vmatpush1.bf16.msra.mxu0 %v926
  %1490 = vmatprep.subr.bf16.mxu0 %v959
  %1491 = vmatpush1.bf16.msra.mxu0 %v958
  %1492 = vmatprep.subr.bf16.mxu0 %v991
  %1493 = vmatpush1.bf16.msra.mxu0 %v990
  %1494 = vmatprep.subr.bf16.mxu0 %v1023
  %1495 = vmatpush1.bf16.msra.mxu0 %v1022
  %1496 = vmatprep.subr.bf16.mxu0 %v1298
  %1497 = vmatpush1.bf16.msra.mxu0 %v1295
  %1498 = vmatprep.subr.bf16.mxu0 0
  %1499 = vmatpush1.bf16.msra.mxu0 0
  %1500 = vmatprep.subr.bf16.mxu0 0
  %1501 = vmatpush1.bf16.msra.mxu0 0
  %1502 = vmatprep.subr.bf16.mxu0 0
  %1503 = vmatpush1.bf16.msra.mxu0 0
  %1504 = vmatprep.subr.bf16.mxu0 0
  %1505 = vmatpush1.bf16.msra.mxu0 0
  %1506 = vmatprep.subr.bf16.mxu0 0
  %1507 = vmatpush1.bf16.msra.mxu0 0
  %1508 = vmatprep.subr.bf16.mxu0 0
  %1509 = vmatpush1.bf16.msra.mxu0 0
  %1510 = vmatprep.subr.bf16.mxu0 0
  %1511 = vmatpush1.bf16.msra.mxu0 0
  %1512 = vmatprep.subr.bf16.mxu0 0
  %1513 = vmatpush1.bf16.msra.mxu0 0
  %1514 = vmatprep.subr.bf16.mxu0 0
  %1515 = vmatpush1.bf16.msra.mxu0 0
  %1516 = vmatprep.mubr.bf16.mxu0 0
  %1517 = vmatmul.mubr.bf16.gmra.mrb[0].mxu0 %v1276
  %v1518 = vpop.f32.mrb[0].mxu0
  %v1519 = vadd.f32 0.0, %v1518
  %v1520 = vpop.f32.mrb[0].mxu0
  %v1521 = vadd.f32 0.0, %v1520
  %v1522 = vpop.f32.mrb[0].mxu0
  %v1523 = vadd.f32 0.0, %v1522
  %v1524 = vpop.f32.mrb[0].mxu0
  %v1525 = vadd.f32 0.0, %v1524
  %1526 = vmatprep.mubr.bf16.mxu0 0
  %1527 = vmatmul.mubr.bf16.gmra.mrb[0].mxu0 %v1279
  %v1528 = vpop.f32.mrb[0].mxu0
  %v1529 = vadd.f32 0.0, %v1528
  %v1530 = vpop.f32.mrb[0].mxu0
  %v1531 = vadd.f32 0.0, %v1530
  %v1532 = vpop.f32.mrb[0].mxu0
  %v1533 = vadd.f32 0.0, %v1532
  %v1534 = vpop.f32.mrb[0].mxu0
  %v1535 = vadd.f32 0.0, %v1534
  %1536 = vdwg.mxu0
  %1537 = vmatprep.subr.bf16.mxu0 %v865
  %1538 = vmatpush1.bf16.msra.mxu0 %v864
  %1539 = vmatprep.subr.bf16.mxu0 %v897
  %1540 = vmatpush1.bf16.msra.mxu0 %v896
  %1541 = vmatprep.subr.bf16.mxu0 %v929
  %1542 = vmatpush1.bf16.msra.mxu0 %v928
  %1543 = vmatprep.subr.bf16.mxu0 %v961
  %1544 = vmatpush1.bf16.msra.mxu0 %v960
  %1545 = vmatprep.subr.bf16.mxu0 %v993
  %1546 = vmatpush1.bf16.msra.mxu0 %v992
  %1547 = vmatprep.subr.bf16.mxu0 %v1025
  %1548 = vmatpush1.bf16.msra.mxu0 %v1024
  %1549 = vmatprep.subr.bf16.mxu0 %v1304
  %1550 = vmatpush1.bf16.msra.mxu0 %v1301
  %1551 = vmatprep.subr.bf16.mxu0 0
  %1552 = vmatpush1.bf16.msra.mxu0 0
  %1553 = vmatprep.subr.bf16.mxu0 0
  %1554 = vmatpush1.bf16.msra.mxu0 0
  %1555 = vmatprep.subr.bf16.mxu0 0
  %1556 = vmatpush1.bf16.msra.mxu0 0
  %1557 = vmatprep.subr.bf16.mxu0 0
  %1558 = vmatpush1.bf16.msra.mxu0 0
  %1559 = vmatprep.subr.bf16.mxu0 0
  %1560 = vmatpush1.bf16.msra.mxu0 0
  %1561 = vmatprep.subr.bf16.mxu0 0
  %1562 = vmatpush1.bf16.msra.mxu0 0
  %1563 = vmatprep.subr.bf16.mxu0 0
  %1564 = vmatpush1.bf16.msra.mxu0 0
  %1565 = vmatprep.subr.bf16.mxu0 0
  %1566 = vmatpush1.bf16.msra.mxu0 0
  %1567 = vmatprep.subr.bf16.mxu0 0
  %1568 = vmatpush1.bf16.msra.mxu0 0
  %1569 = vmatprep.mubr.bf16.mxu0 0
  %1570 = vmatmul.mubr.bf16.gmra.mrb[0].mxu0 %v1276
  %v1571 = vpop.f32.mrb[0].mxu0
  %v1572 = vadd.f32 0.0, %v1571
  %v1573 = vpop.f32.mrb[0].mxu0
  %v1574 = vadd.f32 0.0, %v1573
  %v1575 = vpop.f32.mrb[0].mxu0
  %v1576 = vadd.f32 0.0, %v1575
  %v1577 = vpop.f32.mrb[0].mxu0
  %v1578 = vadd.f32 0.0, %v1577
  %1579 = vmatprep.mubr.bf16.mxu0 0
  %1580 = vmatmul.mubr.bf16.gmra.mrb[0].mxu0 %v1279
  %v1581 = vpop.f32.mrb[0].mxu0
  %v1582 = vadd.f32 0.0, %v1581
  %v1583 = vpop.f32.mrb[0].mxu0
  %v1584 = vadd.f32 0.0, %v1583
  %v1585 = vpop.f32.mrb[0].mxu0
  %v1586 = vadd.f32 0.0, %v1585
  %v1587 = vpop.f32.mrb[0].mxu0
  %v1588 = vadd.f32 0.0, %v1587
  %1589 = vdwg.mxu0
  %1590 = vmatprep.subr.bf16.mxu0 %v867
  %1591 = vmatpush1.bf16.msra.mxu0 %v866
  %1592 = vmatprep.subr.bf16.mxu0 %v899
  %1593 = vmatpush1.bf16.msra.mxu0 %v898
  %1594 = vmatprep.subr.bf16.mxu0 %v931
  %1595 = vmatpush1.bf16.msra.mxu0 %v930
  %1596 = vmatprep.subr.bf16.mxu0 %v963
  %1597 = vmatpush1.bf16.msra.mxu0 %v962
  %1598 = vmatprep.subr.bf16.mxu0 %v995
  %1599 = vmatpush1.bf16.msra.mxu0 %v994
  %1600 = vmatprep.subr.bf16.mxu0 %v1027
  %1601 = vmatpush1.bf16.msra.mxu0 %v1026
  %1602 = vmatprep.subr.bf16.mxu0 %v1310
  %1603 = vmatpush1.bf16.msra.mxu0 %v1307
  %1604 = vmatprep.subr.bf16.mxu0 0
  %1605 = vmatpush1.bf16.msra.mxu0 0
  %1606 = vmatprep.subr.bf16.mxu0 0
  %1607 = vmatpush1.bf16.msra.mxu0 0
  %1608 = vmatprep.subr.bf16.mxu0 0
  %1609 = vmatpush1.bf16.msra.mxu0 0
  %1610 = vmatprep.subr.bf16.mxu0 0
  %1611 = vmatpush1.bf16.msra.mxu0 0
  %1612 = vmatprep.subr.bf16.mxu0 0
  %1613 = vmatpush1.bf16.msra.mxu0 0
  %1614 = vmatprep.subr.bf16.mxu0 0
  %1615 = vmatpush1.bf16.msra.mxu0 0
  %1616 = vmatprep.subr.bf16.mxu0 0
  %1617 = vmatpush1.bf16.msra.mxu0 0
  %1618 = vmatprep.subr.bf16.mxu0 0
  %1619 = vmatpush1.bf16.msra.mxu0 0
  %1620 = vmatprep.subr.bf16.mxu0 0
  %1621 = vmatpush1.bf16.msra.mxu0 0
  %1622 = vmatprep.mubr.bf16.mxu0 0
  %1623 = vmatmul.mubr.bf16.gmra.mrb[0].mxu0 %v1276
  %v1624 = vpop.f32.mrb[0].mxu0
  %v1625 = vadd.f32 0.0, %v1624
  %v1626 = vpop.f32.mrb[0].mxu0
  %v1627 = vadd.f32 0.0, %v1626
  %v1628 = vpop.f32.mrb[0].mxu0
  %v1629 = vadd.f32 0.0, %v1628
  %v1630 = vpop.f32.mrb[0].mxu0
  %v1631 = vadd.f32 0.0, %v1630
  %1632 = vmatprep.mubr.bf16.mxu0 0
  %1633 = vmatmul.mubr.bf16.gmra.mrb[0].mxu0 %v1279
  %v1634 = vpop.f32.mrb[0].mxu0
  %v1635 = vadd.f32 0.0, %v1634
  %v1636 = vpop.f32.mrb[0].mxu0
  %v1637 = vadd.f32 0.0, %v1636
  %v1638 = vpop.f32.mrb[0].mxu0
  %v1639 = vadd.f32 0.0, %v1638
  %v1640 = vpop.f32.mrb[0].mxu0
  %v1641 = vadd.f32 0.0, %v1640
  %1642 = vdwg.mxu0
  %1643 = vmatprep.subr.bf16.mxu0 %v869
  %1644 = vmatpush1.bf16.msra.mxu0 %v868
  %1645 = vmatprep.subr.bf16.mxu0 %v901
  %1646 = vmatpush1.bf16.msra.mxu0 %v900
  %1647 = vmatprep.subr.bf16.mxu0 %v933
  %1648 = vmatpush1.bf16.msra.mxu0 %v932
  %1649 = vmatprep.subr.bf16.mxu0 %v965
  %1650 = vmatpush1.bf16.msra.mxu0 %v964
  %1651 = vmatprep.subr.bf16.mxu0 %v997
  %1652 = vmatpush1.bf16.msra.mxu0 %v996
  %1653 = vmatprep.subr.bf16.mxu0 %v1029
  %1654 = vmatpush1.bf16.msra.mxu0 %v1028
  %1655 = vmatprep.subr.bf16.mxu0 %v1316
  %1656 = vmatpush1.bf16.msra.mxu0 %v1313
  %1657 = vmatprep.subr.bf16.mxu0 0
  %1658 = vmatpush1.bf16.msra.mxu0 0
  %1659 = vmatprep.subr.bf16.mxu0 0
  %1660 = vmatpush1.bf16.msra.mxu0 0
  %1661 = vmatprep.subr.bf16.mxu0 0
  %1662 = vmatpush1.bf16.msra.mxu0 0
  %1663 = vmatprep.subr.bf16.mxu0 0
  %1664 = vmatpush1.bf16.msra.mxu0 0
  %1665 = vmatprep.subr.bf16.mxu0 0
  %1666 = vmatpush1.bf16.msra.mxu0 0
  %1667 = vmatprep.subr.bf16.mxu0 0
  %1668 = vmatpush1.bf16.msra.mxu0 0
  %1669 = vmatprep.subr.bf16.mxu0 0
  %1670 = vmatpush1.bf16.msra.mxu0 0
  %1671 = vmatprep.subr.bf16.mxu0 0
  %1672 = vmatpush1.bf16.msra.mxu0 0
  %1673 = vmatprep.subr.bf16.mxu0 0
  %1674 = vmatpush1.bf16.msra.mxu0 0
  %1675 = vmatprep.mubr.bf16.mxu0 0
  %1676 = vmatmul.mubr.bf16.gmra.mrb[0].mxu0 %v1276
  %v1677 = vpop.f32.mrb[0].mxu0
  %v1678 = vadd.f32 0.0, %v1677
  %v1679 = vpop.f32.mrb[0].mxu0
  %v1680 = vadd.f32 0.0, %v1679
  %v1681 = vpop.f32.mrb[0].mxu0
  %v1682 = vadd.f32 0.0, %v1681
  %v1683 = vpop.f32.mrb[0].mxu0
  %v1684 = vadd.f32 0.0, %v1683
  %1685 = vmatprep.mubr.bf16.mxu0 0
  %1686 = vmatmul.mubr.bf16.gmra.mrb[0].mxu0 %v1279
  %v1687 = vpop.f32.mrb[0].mxu0
  %v1688 = vadd.f32 0.0, %v1687
  %v1689 = vpop.f32.mrb[0].mxu0
  %v1690 = vadd.f32 0.0, %v1689
  %v1691 = vpop.f32.mrb[0].mxu0
  %v1692 = vadd.f32 0.0, %v1691
  %v1693 = vpop.f32.mrb[0].mxu0
  %v1694 = vadd.f32 0.0, %v1693
  %1695 = vdwg.mxu0
  %1696 = vmatprep.subr.bf16.mxu0 %v871
  %1697 = vmatpush1.bf16.msra.mxu0 %v870
  %1698 = vmatprep.subr.bf16.mxu0 %v903
  %1699 = vmatpush1.bf16.msra.mxu0 %v902
  %1700 = vmatprep.subr.bf16.mxu0 %v935
  %1701 = vmatpush1.bf16.msra.mxu0 %v934
  %1702 = vmatprep.subr.bf16.mxu0 %v967
  %1703 = vmatpush1.bf16.msra.mxu0 %v966
  %1704 = vmatprep.subr.bf16.mxu0 %v999
  %1705 = vmatpush1.bf16.msra.mxu0 %v998
  %1706 = vmatprep.subr.bf16.mxu0 %v1031
  %1707 = vmatpush1.bf16.msra.mxu0 %v1030
  %1708 = vmatprep.subr.bf16.mxu0 %v1322
  %1709 = vmatpush1.bf16.msra.mxu0 %v1319
  %1710 = vmatprep.subr.bf16.mxu0 0
  %1711 = vmatpush1.bf16.msra.mxu0 0
  %1712 = vmatprep.subr.bf16.mxu0 0
  %1713 = vmatpush1.bf16.msra.mxu0 0
  %1714 = vmatprep.subr.bf16.mxu0 0
  %1715 = vmatpush1.bf16.msra.mxu0 0
  %1716 = vmatprep.subr.bf16.mxu0 0
  %1717 = vmatpush1.bf16.msra.mxu0 0
  %1718 = vmatprep.subr.bf16.mxu0 0
  %1719 = vmatpush1.bf16.msra.mxu0 0
  %1720 = vmatprep.subr.bf16.mxu0 0
  %1721 = vmatpush1.bf16.msra.mxu0 0
  %1722 = vmatprep.subr.bf16.mxu0 0
  %1723 = vmatpush1.bf16.msra.mxu0 0
  %1724 = vmatprep.subr.bf16.mxu0 0
  %1725 = vmatpush1.bf16.msra.mxu0 0
  %1726 = vmatprep.subr.bf16.mxu0 0
  %1727 = vmatpush1.bf16.msra.mxu0 0
  %1728 = vmatprep.mubr.bf16.mxu0 0
  %1729 = vmatmul.mubr.bf16.gmra.mrb[0].mxu0 %v1276
  %v1730 = vpop.f32.mrb[0].mxu0
  %v1731 = vadd.f32 0.0, %v1730
  %v1732 = vpop.f32.mrb[0].mxu0
  %v1733 = vadd.f32 0.0, %v1732
  %v1734 = vpop.f32.mrb[0].mxu0
  %v1735 = vadd.f32 0.0, %v1734
  %v1736 = vpop.f32.mrb[0].mxu0
  %v1737 = vadd.f32 0.0, %v1736
  %1738 = vmatprep.mubr.bf16.mxu0 0
  %1739 = vmatmul.mubr.bf16.gmra.mrb[0].mxu0 %v1279
  %v1740 = vpop.f32.mrb[0].mxu0
  %v1741 = vadd.f32 0.0, %v1740
  %v1742 = vpop.f32.mrb[0].mxu0
  %v1743 = vadd.f32 0.0, %v1742
  %v1744 = vpop.f32.mrb[0].mxu0
  %v1745 = vadd.f32 0.0, %v1744
  %v1746 = vpop.f32.mrb[0].mxu0
  %v1747 = vadd.f32 0.0, %v1746
  %1748 = vdwg.mxu0
  %1749 = vmatprep.subr.bf16.mxu0 %v873
  %1750 = vmatpush1.bf16.msra.mxu0 %v872
  %1751 = vmatprep.subr.bf16.mxu0 %v905
  %1752 = vmatpush1.bf16.msra.mxu0 %v904
  %1753 = vmatprep.subr.bf16.mxu0 %v937
  %1754 = vmatpush1.bf16.msra.mxu0 %v936
  %1755 = vmatprep.subr.bf16.mxu0 %v969
  %1756 = vmatpush1.bf16.msra.mxu0 %v968
  %1757 = vmatprep.subr.bf16.mxu0 %v1001
  %1758 = vmatpush1.bf16.msra.mxu0 %v1000
  %1759 = vmatprep.subr.bf16.mxu0 %v1033
  %1760 = vmatpush1.bf16.msra.mxu0 %v1032
  %1761 = vmatprep.subr.bf16.mxu0 %v1328
  %1762 = vmatpush1.bf16.msra.mxu0 %v1325
  %1763 = vmatprep.subr.bf16.mxu0 0
  %1764 = vmatpush1.bf16.msra.mxu0 0
  %1765 = vmatprep.subr.bf16.mxu0 0
  %1766 = vmatpush1.bf16.msra.mxu0 0
  %1767 = vmatprep.subr.bf16.mxu0 0
  %1768 = vmatpush1.bf16.msra.mxu0 0
  %1769 = vmatprep.subr.bf16.mxu0 0
  %1770 = vmatpush1.bf16.msra.mxu0 0
  %1771 = vmatprep.subr.bf16.mxu0 0
  %1772 = vmatpush1.bf16.msra.mxu0 0
  %1773 = vmatprep.subr.bf16.mxu0 0
  %1774 = vmatpush1.bf16.msra.mxu0 0
  %1775 = vmatprep.subr.bf16.mxu0 0
  %1776 = vmatpush1.bf16.msra.mxu0 0
  %1777 = vmatprep.subr.bf16.mxu0 0
  %1778 = vmatpush1.bf16.msra.mxu0 0
  %1779 = vmatprep.subr.bf16.mxu0 0
  %1780 = vmatpush1.bf16.msra.mxu0 0
  %1781 = vmatprep.mubr.bf16.mxu0 0
  %1782 = vmatmul.mubr.bf16.gmra.mrb[0].mxu0 %v1276
  %v1783 = vpop.f32.mrb[0].mxu0
  %v1784 = vadd.f32 0.0, %v1783
  %v1785 = vpop.f32.mrb[0].mxu0
  %v1786 = vadd.f32 0.0, %v1785
  %v1787 = vpop.f32.mrb[0].mxu0
  %v1788 = vadd.f32 0.0, %v1787
  %v1789 = vpop.f32.mrb[0].mxu0
  %v1790 = vadd.f32 0.0, %v1789
  %1791 = vmatprep.mubr.bf16.mxu0 0
  %1792 = vmatmul.mubr.bf16.gmra.mrb[0].mxu0 %v1279
  %v1793 = vpop.f32.mrb[0].mxu0
  %v1794 = vadd.f32 0.0, %v1793
  %v1795 = vpop.f32.mrb[0].mxu0
  %v1796 = vadd.f32 0.0, %v1795
  %v1797 = vpop.f32.mrb[0].mxu0
  %v1798 = vadd.f32 0.0, %v1797
  %v1799 = vpop.f32.mrb[0].mxu0
  %v1800 = vadd.f32 0.0, %v1799
  %1801 = vdwg.mxu0
  %1802 = vmatprep.subr.bf16.mxu0 %v875
  %1803 = vmatpush1.bf16.msra.mxu0 %v874
  %1804 = vmatprep.subr.bf16.mxu0 %v907
  %1805 = vmatpush1.bf16.msra.mxu0 %v906
  %1806 = vmatprep.subr.bf16.mxu0 %v939
  %1807 = vmatpush1.bf16.msra.mxu0 %v938
  %1808 = vmatprep.subr.bf16.mxu0 %v971
  %1809 = vmatpush1.bf16.msra.mxu0 %v970
  %1810 = vmatprep.subr.bf16.mxu0 %v1003
  %1811 = vmatpush1.bf16.msra.mxu0 %v1002
  %1812 = vmatprep.subr.bf16.mxu0 %v1035
  %1813 = vmatpush1.bf16.msra.mxu0 %v1034
  %1814 = vmatprep.subr.bf16.mxu0 %v1334
  %1815 = vmatpush1.bf16.msra.mxu0 %v1331
  %1816 = vmatprep.subr.bf16.mxu0 0
  %1817 = vmatpush1.bf16.msra.mxu0 0
  %1818 = vmatprep.subr.bf16.mxu0 0
  %1819 = vmatpush1.bf16.msra.mxu0 0
  %1820 = vmatprep.subr.bf16.mxu0 0
  %1821 = vmatpush1.bf16.msra.mxu0 0
  %1822 = vmatprep.subr.bf16.mxu0 0
  %1823 = vmatpush1.bf16.msra.mxu0 0
  %1824 = vmatprep.subr.bf16.mxu0 0
  %1825 = vmatpush1.bf16.msra.mxu0 0
  %1826 = vmatprep.subr.bf16.mxu0 0
  %1827 = vmatpush1.bf16.msra.mxu0 0
  %1828 = vmatprep.subr.bf16.mxu0 0
  %1829 = vmatpush1.bf16.msra.mxu0 0
  %1830 = vmatprep.subr.bf16.mxu0 0
  %1831 = vmatpush1.bf16.msra.mxu0 0
  %1832 = vmatprep.subr.bf16.mxu0 0
  %1833 = vmatpush1.bf16.msra.mxu0 0
  %1834 = vmatprep.mubr.bf16.mxu0 0
  %1835 = vmatmul.mubr.bf16.gmra.mrb[0].mxu0 %v1276
  %v1836 = vpop.f32.mrb[0].mxu0
  %v1837 = vadd.f32 0.0, %v1836
  %v1838 = vpop.f32.mrb[0].mxu0
  %v1839 = vadd.f32 0.0, %v1838
  %v1840 = vpop.f32.mrb[0].mxu0
  %v1841 = vadd.f32 0.0, %v1840
  %v1842 = vpop.f32.mrb[0].mxu0
  %v1843 = vadd.f32 0.0, %v1842
  %1844 = vmatprep.mubr.bf16.mxu0 0
  %1845 = vmatmul.mubr.bf16.gmra.mrb[0].mxu0 %v1279
  %v1846 = vpop.f32.mrb[0].mxu0
  %v1847 = vadd.f32 0.0, %v1846
  %v1848 = vpop.f32.mrb[0].mxu0
  %v1849 = vadd.f32 0.0, %v1848
  %v1850 = vpop.f32.mrb[0].mxu0
  %v1851 = vadd.f32 0.0, %v1850
  %v1852 = vpop.f32.mrb[0].mxu0
  %v1853 = vadd.f32 0.0, %v1852
  %1854 = vdwg.mxu0
  %1855 = vmatprep.subr.bf16.mxu0 %v877
  %1856 = vmatpush1.bf16.msra.mxu0 %v876
  %1857 = vmatprep.subr.bf16.mxu0 %v909
  %1858 = vmatpush1.bf16.msra.mxu0 %v908
  %1859 = vmatprep.subr.bf16.mxu0 %v941
  %1860 = vmatpush1.bf16.msra.mxu0 %v940
  %1861 = vmatprep.subr.bf16.mxu0 %v973
  %1862 = vmatpush1.bf16.msra.mxu0 %v972
  %1863 = vmatprep.subr.bf16.mxu0 %v1005
  %1864 = vmatpush1.bf16.msra.mxu0 %v1004
  %1865 = vmatprep.subr.bf16.mxu0 %v1037
  %1866 = vmatpush1.bf16.msra.mxu0 %v1036
  %1867 = vmatprep.subr.bf16.mxu0 %v1340
  %1868 = vmatpush1.bf16.msra.mxu0 %v1337
  %1869 = vmatprep.subr.bf16.mxu0 0
  %1870 = vmatpush1.bf16.msra.mxu0 0
  %1871 = vmatprep.subr.bf16.mxu0 0
  %1872 = vmatpush1.bf16.msra.mxu0 0
  %1873 = vmatprep.subr.bf16.mxu0 0
  %1874 = vmatpush1.bf16.msra.mxu0 0
  %1875 = vmatprep.subr.bf16.mxu0 0
  %1876 = vmatpush1.bf16.msra.mxu0 0
  %1877 = vmatprep.subr.bf16.mxu0 0
  %1878 = vmatpush1.bf16.msra.mxu0 0
  %1879 = vmatprep.subr.bf16.mxu0 0
  %1880 = vmatpush1.bf16.msra.mxu0 0
  %1881 = vmatprep.subr.bf16.mxu0 0
  %1882 = vmatpush1.bf16.msra.mxu0 0
  %1883 = vmatprep.subr.bf16.mxu0 0
  %1884 = vmatpush1.bf16.msra.mxu0 0
  %1885 = vmatprep.subr.bf16.mxu0 0
  %1886 = vmatpush1.bf16.msra.mxu0 0
  %1887 = vmatprep.mubr.bf16.mxu0 0
  %1888 = vmatmul.mubr.bf16.gmra.mrb[0].mxu0 %v1276
  %v1889 = vpop.f32.mrb[0].mxu0
  %v1890 = vadd.f32 0.0, %v1889
  %v1891 = vpop.f32.mrb[0].mxu0
  %v1892 = vadd.f32 0.0, %v1891
  %v1893 = vpop.f32.mrb[0].mxu0
  %v1894 = vadd.f32 0.0, %v1893
  %v1895 = vpop.f32.mrb[0].mxu0
  %v1896 = vadd.f32 0.0, %v1895
  %1897 = vmatprep.mubr.bf16.mxu0 0
  %1898 = vmatmul.mubr.bf16.gmra.mrb[0].mxu0 %v1279
  %v1899 = vpop.f32.mrb[0].mxu0
  %v1900 = vadd.f32 0.0, %v1899
  %v1901 = vpop.f32.mrb[0].mxu0
  %v1902 = vadd.f32 0.0, %v1901
  %v1903 = vpop.f32.mrb[0].mxu0
  %v1904 = vadd.f32 0.0, %v1903
  %v1905 = vpop.f32.mrb[0].mxu0
  %v1906 = vadd.f32 0.0, %v1905
  %1907 = vdwg.mxu0
  %1908 = vmatprep.subr.bf16.mxu0 %v879
  %1909 = vmatpush1.bf16.msra.mxu0 %v878
  %1910 = vmatprep.subr.bf16.mxu0 %v911
  %1911 = vmatpush1.bf16.msra.mxu0 %v910
  %1912 = vmatprep.subr.bf16.mxu0 %v943
  %1913 = vmatpush1.bf16.msra.mxu0 %v942
  %1914 = vmatprep.subr.bf16.mxu0 %v975
  %1915 = vmatpush1.bf16.msra.mxu0 %v974
  %1916 = vmatprep.subr.bf16.mxu0 %v1007
  %1917 = vmatpush1.bf16.msra.mxu0 %v1006
  %1918 = vmatprep.subr.bf16.mxu0 %v1039
  %1919 = vmatpush1.bf16.msra.mxu0 %v1038
  %1920 = vmatprep.subr.bf16.mxu0 %v1346
  %1921 = vmatpush1.bf16.msra.mxu0 %v1343
  %1922 = vmatprep.subr.bf16.mxu0 0
  %1923 = vmatpush1.bf16.msra.mxu0 0
  %1924 = vmatprep.subr.bf16.mxu0 0
  %1925 = vmatpush1.bf16.msra.mxu0 0
  %1926 = vmatprep.subr.bf16.mxu0 0
  %1927 = vmatpush1.bf16.msra.mxu0 0
  %1928 = vmatprep.subr.bf16.mxu0 0
  %1929 = vmatpush1.bf16.msra.mxu0 0
  %1930 = vmatprep.subr.bf16.mxu0 0
  %1931 = vmatpush1.bf16.msra.mxu0 0
  %1932 = vmatprep.subr.bf16.mxu0 0
  %1933 = vmatpush1.bf16.msra.mxu0 0
  %1934 = vmatprep.subr.bf16.mxu0 0
  %1935 = vmatpush1.bf16.msra.mxu0 0
  %1936 = vmatprep.subr.bf16.mxu0 0
  %1937 = vmatpush1.bf16.msra.mxu0 0
  %1938 = vmatprep.subr.bf16.mxu0 0
  %1939 = vmatpush1.bf16.msra.mxu0 0
  %1940 = vmatprep.mubr.bf16.mxu0 0
  %1941 = vmatmul.mubr.bf16.gmra.mrb[0].mxu0 %v1276
  %v1942 = vpop.f32.mrb[0].mxu0
  %v1943 = vadd.f32 0.0, %v1942
  %v1944 = vpop.f32.mrb[0].mxu0
  %v1945 = vadd.f32 0.0, %v1944
  %v1946 = vpop.f32.mrb[0].mxu0
  %v1947 = vadd.f32 0.0, %v1946
  %v1948 = vpop.f32.mrb[0].mxu0
  %v1949 = vadd.f32 0.0, %v1948
  %1950 = vmatprep.mubr.bf16.mxu0 0
  %1951 = vmatmul.mubr.bf16.gmra.mrb[0].mxu0 %v1279
  %v1952 = vpop.f32.mrb[0].mxu0
  %v1953 = vadd.f32 0.0, %v1952
  %v1954 = vpop.f32.mrb[0].mxu0
  %v1955 = vadd.f32 0.0, %v1954
  %v1956 = vpop.f32.mrb[0].mxu0
  %v1957 = vadd.f32 0.0, %v1956
  %v1958 = vpop.f32.mrb[0].mxu0
  %v1959 = vadd.f32 0.0, %v1958
  %1960 = vdwg.mxu0
  %1961 = vmatprep.subr.bf16.mxu0 %v881
  %1962 = vmatpush1.bf16.msra.mxu0 %v880
  %1963 = vmatprep.subr.bf16.mxu0 %v913
  %1964 = vmatpush1.bf16.msra.mxu0 %v912
  %1965 = vmatprep.subr.bf16.mxu0 %v945
  %1966 = vmatpush1.bf16.msra.mxu0 %v944
  %1967 = vmatprep.subr.bf16.mxu0 %v977
  %1968 = vmatpush1.bf16.msra.mxu0 %v976
  %1969 = vmatprep.subr.bf16.mxu0 %v1009
  %1970 = vmatpush1.bf16.msra.mxu0 %v1008
  %1971 = vmatprep.subr.bf16.mxu0 %v1041
  %1972 = vmatpush1.bf16.msra.mxu0 %v1040
  %1973 = vmatprep.subr.bf16.mxu0 %v1352
  %1974 = vmatpush1.bf16.msra.mxu0 %v1349
  %1975 = vmatprep.subr.bf16.mxu0 0
  %1976 = vmatpush1.bf16.msra.mxu0 0
  %1977 = vmatprep.subr.bf16.mxu0 0
  %1978 = vmatpush1.bf16.msra.mxu0 0
  %1979 = vmatprep.subr.bf16.mxu0 0
  %1980 = vmatpush1.bf16.msra.mxu0 0
  %1981 = vmatprep.subr.bf16.mxu0 0
  %1982 = vmatpush1.bf16.msra.mxu0 0
  %1983 = vmatprep.subr.bf16.mxu0 0
  %1984 = vmatpush1.bf16.msra.mxu0 0
  %1985 = vmatprep.subr.bf16.mxu0 0
  %1986 = vmatpush1.bf16.msra.mxu0 0
  %1987 = vmatprep.subr.bf16.mxu0 0
  %1988 = vmatpush1.bf16.msra.mxu0 0
  %1989 = vmatprep.subr.bf16.mxu0 0
  %1990 = vmatpush1.bf16.msra.mxu0 0
  %1991 = vmatprep.subr.bf16.mxu0 0
  %1992 = vmatpush1.bf16.msra.mxu0 0
  %1993 = vmatprep.mubr.bf16.mxu0 0
  %1994 = vmatmul.mubr.bf16.gmra.mrb[0].mxu0 %v1276
  %v1995 = vpop.f32.mrb[0].mxu0
  %v1996 = vadd.f32 0.0, %v1995
  %v1997 = vpop.f32.mrb[0].mxu0
  %v1998 = vadd.f32 0.0, %v1997
  %v1999 = vpop.f32.mrb[0].mxu0
  %v2000 = vadd.f32 0.0, %v1999
  %v2001 = vpop.f32.mrb[0].mxu0
  %v2002 = vadd.f32 0.0, %v2001
  %2003 = vmatprep.mubr.bf16.mxu0 0
  %2004 = vmatmul.mubr.bf16.gmra.mrb[0].mxu0 %v1279
  %v2005 = vpop.f32.mrb[0].mxu0
  %v2006 = vadd.f32 0.0, %v2005
  %v2007 = vpop.f32.mrb[0].mxu0
  %v2008 = vadd.f32 0.0, %v2007
  %v2009 = vpop.f32.mrb[0].mxu0
  %v2010 = vadd.f32 0.0, %v2009
  %v2011 = vpop.f32.mrb[0].mxu0
  %v2012 = vadd.f32 0.0, %v2011
  %2013 = vdwg.mxu0
  %2014 = vmatprep.subr.bf16.mxu0 %v883
  %2015 = vmatpush1.bf16.msra.mxu0 %v882
  %2016 = vmatprep.subr.bf16.mxu0 %v915
  %2017 = vmatpush1.bf16.msra.mxu0 %v914
  %2018 = vmatprep.subr.bf16.mxu0 %v947
  %2019 = vmatpush1.bf16.msra.mxu0 %v946
  %2020 = vmatprep.subr.bf16.mxu0 %v979
  %2021 = vmatpush1.bf16.msra.mxu0 %v978
  %2022 = vmatprep.subr.bf16.mxu0 %v1011
  %2023 = vmatpush1.bf16.msra.mxu0 %v1010
  %2024 = vmatprep.subr.bf16.mxu0 %v1043
  %2025 = vmatpush1.bf16.msra.mxu0 %v1042
  %2026 = vmatprep.subr.bf16.mxu0 %v1358
  %2027 = vmatpush1.bf16.msra.mxu0 %v1355
  %2028 = vmatprep.subr.bf16.mxu0 0
  %2029 = vmatpush1.bf16.msra.mxu0 0
  %2030 = vmatprep.subr.bf16.mxu0 0
  %2031 = vmatpush1.bf16.msra.mxu0 0
  %2032 = vmatprep.subr.bf16.mxu0 0
  %2033 = vmatpush1.bf16.msra.mxu0 0
  %2034 = vmatprep.subr.bf16.mxu0 0
  %2035 = vmatpush1.bf16.msra.mxu0 0
  %2036 = vmatprep.subr.bf16.mxu0 0
  %2037 = vmatpush1.bf16.msra.mxu0 0
  %2038 = vmatprep.subr.bf16.mxu0 0
  %2039 = vmatpush1.bf16.msra.mxu0 0
  %2040 = vmatprep.subr.bf16.mxu0 0
  %2041 = vmatpush1.bf16.msra.mxu0 0
  %2042 = vmatprep.subr.bf16.mxu0 0
  %2043 = vmatpush1.bf16.msra.mxu0 0
  %2044 = vmatprep.subr.bf16.mxu0 0
  %2045 = vmatpush1.bf16.msra.mxu0 0
  %2046 = vmatprep.mubr.bf16.mxu0 0
  %2047 = vmatmul.mubr.bf16.gmra.mrb[0].mxu0 %v1276
  %v2048 = vpop.f32.mrb[0].mxu0
  %v2049 = vadd.f32 0.0, %v2048
  %v2050 = vpop.f32.mrb[0].mxu0
  %v2051 = vadd.f32 0.0, %v2050
  %v2052 = vpop.f32.mrb[0].mxu0
  %v2053 = vadd.f32 0.0, %v2052
  %v2054 = vpop.f32.mrb[0].mxu0
  %v2055 = vadd.f32 0.0, %v2054
  %2056 = vmatprep.mubr.bf16.mxu0 0
  %2057 = vmatmul.mubr.bf16.gmra.mrb[0].mxu0 %v1279
  %v2058 = vpop.f32.mrb[0].mxu0
  %v2059 = vadd.f32 0.0, %v2058
  %v2060 = vpop.f32.mrb[0].mxu0
  %v2061 = vadd.f32 0.0, %v2060
  %v2062 = vpop.f32.mrb[0].mxu0
  %v2063 = vadd.f32 0.0, %v2062
  %v2064 = vpop.f32.mrb[0].mxu0
  %v2065 = vadd.f32 0.0, %v2064
  %2066 = vdwg.mxu0
  %2067 = vmatprep.subr.bf16.mxu0 %v885
  %2068 = vmatpush1.bf16.msra.mxu0 %v884
  %2069 = vmatprep.subr.bf16.mxu0 %v917
  %2070 = vmatpush1.bf16.msra.mxu0 %v916
  %2071 = vmatprep.subr.bf16.mxu0 %v949
  %2072 = vmatpush1.bf16.msra.mxu0 %v948
  %2073 = vmatprep.subr.bf16.mxu0 %v981
  %2074 = vmatpush1.bf16.msra.mxu0 %v980
  %2075 = vmatprep.subr.bf16.mxu0 %v1013
  %2076 = vmatpush1.bf16.msra.mxu0 %v1012
  %2077 = vmatprep.subr.bf16.mxu0 %v1045
  %2078 = vmatpush1.bf16.msra.mxu0 %v1044
  %2079 = vmatprep.subr.bf16.mxu0 %v1364
  %2080 = vmatpush1.bf16.msra.mxu0 %v1361
  %2081 = vmatprep.subr.bf16.mxu0 0
  %2082 = vmatpush1.bf16.msra.mxu0 0
  %2083 = vmatprep.subr.bf16.mxu0 0
  %2084 = vmatpush1.bf16.msra.mxu0 0
  %2085 = vmatprep.subr.bf16.mxu0 0
  %2086 = vmatpush1.bf16.msra.mxu0 0
  %2087 = vmatprep.subr.bf16.mxu0 0
  %2088 = vmatpush1.bf16.msra.mxu0 0
  %2089 = vmatprep.subr.bf16.mxu0 0
  %2090 = vmatpush1.bf16.msra.mxu0 0
  %2091 = vmatprep.subr.bf16.mxu0 0
  %2092 = vmatpush1.bf16.msra.mxu0 0
  %2093 = vmatprep.subr.bf16.mxu0 0
  %2094 = vmatpush1.bf16.msra.mxu0 0
  %2095 = vmatprep.subr.bf16.mxu0 0
  %2096 = vmatpush1.bf16.msra.mxu0 0
  %2097 = vmatprep.subr.bf16.mxu0 0
  %2098 = vmatpush1.bf16.msra.mxu0 0
  %2099 = vmatprep.mubr.bf16.mxu0 0
  %2100 = vmatmul.mubr.bf16.gmra.mrb[0].mxu0 %v1276
  %v2101 = vpop.f32.mrb[0].mxu0
  %v2102 = vadd.f32 0.0, %v2101
  %v2103 = vpop.f32.mrb[0].mxu0
  %v2104 = vadd.f32 0.0, %v2103
  %v2105 = vpop.f32.mrb[0].mxu0
  %v2106 = vadd.f32 0.0, %v2105
  %v2107 = vpop.f32.mrb[0].mxu0
  %v2108 = vadd.f32 0.0, %v2107
  %2109 = vmatprep.mubr.bf16.mxu0 0
  %2110 = vmatmul.mubr.bf16.gmra.mrb[0].mxu0 %v1279
  %v2111 = vpop.f32.mrb[0].mxu0
  %v2112 = vadd.f32 0.0, %v2111
  %v2113 = vpop.f32.mrb[0].mxu0
  %v2114 = vadd.f32 0.0, %v2113
  %v2115 = vpop.f32.mrb[0].mxu0
  %v2116 = vadd.f32 0.0, %v2115
  %v2117 = vpop.f32.mrb[0].mxu0
  %v2118 = vadd.f32 0.0, %v2117
  %2119 = vdwg.mxu0
  %2120 = vmatprep.subr.bf16.mxu0 %v887
  %2121 = vmatpush1.bf16.msra.mxu0 %v886
  %2122 = vmatprep.subr.bf16.mxu0 %v919
  %2123 = vmatpush1.bf16.msra.mxu0 %v918
  %2124 = vmatprep.subr.bf16.mxu0 %v951
  %2125 = vmatpush1.bf16.msra.mxu0 %v950
  %2126 = vmatprep.subr.bf16.mxu0 %v983
  %2127 = vmatpush1.bf16.msra.mxu0 %v982
  %2128 = vmatprep.subr.bf16.mxu0 %v1015
  %2129 = vmatpush1.bf16.msra.mxu0 %v1014
  %2130 = vmatprep.subr.bf16.mxu0 %v1047
  %2131 = vmatpush1.bf16.msra.mxu0 %v1046
  %2132 = vmatprep.subr.bf16.mxu0 %v1370
  %2133 = vmatpush1.bf16.msra.mxu0 %v1367
  %2134 = vmatprep.subr.bf16.mxu0 0
  %2135 = vmatpush1.bf16.msra.mxu0 0
  %2136 = vmatprep.subr.bf16.mxu0 0
  %2137 = vmatpush1.bf16.msra.mxu0 0
  %2138 = vmatprep.subr.bf16.mxu0 0
  %2139 = vmatpush1.bf16.msra.mxu0 0
  %2140 = vmatprep.subr.bf16.mxu0 0
  %2141 = vmatpush1.bf16.msra.mxu0 0
  %2142 = vmatprep.subr.bf16.mxu0 0
  %2143 = vmatpush1.bf16.msra.mxu0 0
  %2144 = vmatprep.subr.bf16.mxu0 0
  %2145 = vmatpush1.bf16.msra.mxu0 0
  %2146 = vmatprep.subr.bf16.mxu0 0
  %2147 = vmatpush1.bf16.msra.mxu0 0
  %2148 = vmatprep.subr.bf16.mxu0 0
  %2149 = vmatpush1.bf16.msra.mxu0 0
  %2150 = vmatprep.subr.bf16.mxu0 0
  %2151 = vmatpush1.bf16.msra.mxu0 0
  %2152 = vmatprep.mubr.bf16.mxu0 0
  %2153 = vmatmul.mubr.bf16.gmra.mrb[0].mxu0 %v1276
  %v2154 = vpop.f32.mrb[0].mxu0
  %v2155 = vadd.f32 0.0, %v2154
  %v2156 = vpop.f32.mrb[0].mxu0
  %v2157 = vadd.f32 0.0, %v2156
  %v2158 = vpop.f32.mrb[0].mxu0
  %v2159 = vadd.f32 0.0, %v2158
  %v2160 = vpop.f32.mrb[0].mxu0
  %v2161 = vadd.f32 0.0, %v2160
  %2162 = vmatprep.mubr.bf16.mxu0 0
  %2163 = vmatmul.mubr.bf16.gmra.mrb[0].mxu0 %v1279
  %v2164 = vpop.f32.mrb[0].mxu0
  %v2165 = vadd.f32 0.0, %v2164
  %v2166 = vpop.f32.mrb[0].mxu0
  %v2167 = vadd.f32 0.0, %v2166
  %v2168 = vpop.f32.mrb[0].mxu0
  %v2169 = vadd.f32 0.0, %v2168
  %v2170 = vpop.f32.mrb[0].mxu0
  %v2171 = vadd.f32 0.0, %v2170
  %2172 = vdwg.mxu0
  %2173 = vmatprep.subr.bf16.mxu0 %v889
  %2174 = vmatpush1.bf16.msra.mxu0 %v888
  %2175 = vmatprep.subr.bf16.mxu0 %v921
  %2176 = vmatpush1.bf16.msra.mxu0 %v920
  %2177 = vmatprep.subr.bf16.mxu0 %v953
  %2178 = vmatpush1.bf16.msra.mxu0 %v952
  %2179 = vmatprep.subr.bf16.mxu0 %v985
  %2180 = vmatpush1.bf16.msra.mxu0 %v984
  %2181 = vmatprep.subr.bf16.mxu0 %v1017
  %2182 = vmatpush1.bf16.msra.mxu0 %v1016
  %2183 = vmatprep.subr.bf16.mxu0 %v1049
  %2184 = vmatpush1.bf16.msra.mxu0 %v1048
  %2185 = vmatprep.subr.bf16.mxu0 %v1376
  %2186 = vmatpush1.bf16.msra.mxu0 %v1373
  %2187 = vmatprep.subr.bf16.mxu0 0
  %2188 = vmatpush1.bf16.msra.mxu0 0
  %2189 = vmatprep.subr.bf16.mxu0 0
  %2190 = vmatpush1.bf16.msra.mxu0 0
  %2191 = vmatprep.subr.bf16.mxu0 0
  %2192 = vmatpush1.bf16.msra.mxu0 0
  %2193 = vmatprep.subr.bf16.mxu0 0
  %2194 = vmatpush1.bf16.msra.mxu0 0
  %2195 = vmatprep.subr.bf16.mxu0 0
  %2196 = vmatpush1.bf16.msra.mxu0 0
  %2197 = vmatprep.subr.bf16.mxu0 0
  %2198 = vmatpush1.bf16.msra.mxu0 0
  %2199 = vmatprep.subr.bf16.mxu0 0
  %2200 = vmatpush1.bf16.msra.mxu0 0
  %2201 = vmatprep.subr.bf16.mxu0 0
  %2202 = vmatpush1.bf16.msra.mxu0 0
  %2203 = vmatprep.subr.bf16.mxu0 0
  %2204 = vmatpush1.bf16.msra.mxu0 0
  %2205 = vmatprep.mubr.bf16.mxu0 0
  %2206 = vmatmul.mubr.bf16.gmra.mrb[0].mxu0 %v1276
  %v2207 = vpop.f32.mrb[0].mxu0
  %v2208 = vadd.f32 0.0, %v2207
  %v2209 = vpop.f32.mrb[0].mxu0
  %v2210 = vadd.f32 0.0, %v2209
  %v2211 = vpop.f32.mrb[0].mxu0
  %v2212 = vadd.f32 0.0, %v2211
  %v2213 = vpop.f32.mrb[0].mxu0
  %v2214 = vadd.f32 0.0, %v2213
  %2215 = vmatprep.mubr.bf16.mxu0 0
  %2216 = vmatmul.mubr.bf16.gmra.mrb[0].mxu0 %v1279
  %v2217 = vpop.f32.mrb[0].mxu0
  %v2218 = vadd.f32 0.0, %v2217
  %v2219 = vpop.f32.mrb[0].mxu0
  %v2220 = vadd.f32 0.0, %v2219
  %v2221 = vpop.f32.mrb[0].mxu0
  %v2222 = vadd.f32 0.0, %v2221
  %v2223 = vpop.f32.mrb[0].mxu0
  %v2224 = vadd.f32 0.0, %v2223
  %2225 = vdwg.mxu0
  %v2226 = vpack.c.bf16 %v1417, %v1413
  %v2227 = vpack.c.bf16 %v1419, %v1415
  %v2228 = vpack.c.bf16 %v1470, %v1466
  %v2229 = vpack.c.bf16 %v1472, %v1468
  %v2230 = vpack.c.bf16 %v1523, %v1519
  %v2231 = vpack.c.bf16 %v1525, %v1521
  %v2232 = vpack.c.bf16 %v1576, %v1572
  %v2233 = vpack.c.bf16 %v1578, %v1574
  %v2234 = vpack.c.bf16 %v1629, %v1625
  %v2235 = vpack.c.bf16 %v1631, %v1627
  %v2236 = vpack.c.bf16 %v1682, %v1678
  %v2237 = vpack.c.bf16 %v1684, %v1680
  %v2238 = vpack.c.bf16 %v1735, %v1731
  %v2239 = vpack.c.bf16 %v1737, %v1733
  %v2240 = vpack.c.bf16 %v1788, %v1784
  %v2241 = vpack.c.bf16 %v1790, %v1786
  %v2242 = vpack.c.bf16 %v1841, %v1837
  %v2243 = vpack.c.bf16 %v1843, %v1839
  %v2244 = vpack.c.bf16 %v1894, %v1890
  %v2245 = vpack.c.bf16 %v1896, %v1892
  %v2246 = vpack.c.bf16 %v1947, %v1943
  %v2247 = vpack.c.bf16 %v1949, %v1945
  %v2248 = vpack.c.bf16 %v2000, %v1996
  %v2249 = vpack.c.bf16 %v2002, %v1998
  %v2250 = vpack.c.bf16 %v2053, %v2049
  %v2251 = vpack.c.bf16 %v2055, %v2051
  %v2252 = vpack.c.bf16 %v2106, %v2102
  %v2253 = vpack.c.bf16 %v2108, %v2104
  %v2254 = vpack.c.bf16 %v2159, %v2155
  %v2255 = vpack.c.bf16 %v2161, %v2157
  %v2256 = vpack.c.bf16 %v2212, %v2208
  %v2257 = vpack.c.bf16 %v2214, %v2210
  %v2258 = vpack.c.bf16 %v1427, %v1423
  %v2259 = vpack.c.bf16 %v1429, %v1425
  %v2260 = vpack.c.bf16 %v1480, %v1476
  %v2261 = vpack.c.bf16 %v1482, %v1478
  %v2262 = vpack.c.bf16 %v1533, %v1529
  %v2263 = vpack.c.bf16 %v1535, %v1531
  %v2264 = vpack.c.bf16 %v1586, %v1582
  %v2265 = vpack.c.bf16 %v1588, %v1584
  %v2266 = vpack.c.bf16 %v1639, %v1635
  %v2267 = vpack.c.bf16 %v1641, %v1637
  %v2268 = vpack.c.bf16 %v1692, %v1688
  %v2269 = vpack.c.bf16 %v1694, %v1690
  %v2270 = vpack.c.bf16 %v1745, %v1741
  %v2271 = vpack.c.bf16 %v1747, %v1743
  %v2272 = vpack.c.bf16 %v1798, %v1794
  %v2273 = vpack.c.bf16 %v1800, %v1796
  %v2274 = vpack.c.bf16 %v1851, %v1847
  %v2275 = vpack.c.bf16 %v1853, %v1849
  %v2276 = vpack.c.bf16 %v1904, %v1900
  %v2277 = vpack.c.bf16 %v1906, %v1902
  %v2278 = vpack.c.bf16 %v1957, %v1953
  %v2279 = vpack.c.bf16 %v1959, %v1955
  %v2280 = vpack.c.bf16 %v2010, %v2006
  %v2281 = vpack.c.bf16 %v2012, %v2008
  %v2282 = vpack.c.bf16 %v2063, %v2059
  %v2283 = vpack.c.bf16 %v2065, %v2061
  %v2284 = vpack.c.bf16 %v2116, %v2112
  %v2285 = vpack.c.bf16 %v2118, %v2114
  %v2286 = vpack.c.bf16 %v2169, %v2165
  %v2287 = vpack.c.bf16 %v2171, %v2167
  %v2288 = vpack.c.bf16 %v2222, %v2218
  %v2289 = vpack.c.bf16 %v2224, %v2220
  %v2354 = vunpack.c.l.b16 %v2226
  %v2355 = vunpack.c.l.b16 %v2227
  %v2356 = vunpack.c.l.b16 %v2228
  %v2357 = vunpack.c.l.b16 %v2229
  %v2358 = vunpack.c.l.b16 %v2230
  %v2359 = vunpack.c.l.b16 %v2231
  %v2360 = vunpack.c.l.b16 %v2232
  %v2361 = vunpack.c.l.b16 %v2233
  %v2362 = vunpack.c.l.b16 %v2234
  %v2363 = vunpack.c.l.b16 %v2235
  %v2364 = vunpack.c.l.b16 %v2236
  %v2365 = vunpack.c.l.b16 %v2237
  %v2366 = vunpack.c.l.b16 %v2238
  %v2367 = vunpack.c.l.b16 %v2239
  %v2368 = vunpack.c.l.b16 %v2240
  %v2369 = vunpack.c.l.b16 %v2241
  %v2370 = vunpack.c.l.b16 %v2242
  %v2371 = vunpack.c.l.b16 %v2243
  %v2372 = vunpack.c.l.b16 %v2244
  %v2373 = vunpack.c.l.b16 %v2245
  %v2374 = vunpack.c.l.b16 %v2246
  %v2375 = vunpack.c.l.b16 %v2247
  %v2376 = vunpack.c.l.b16 %v2248
  %v2377 = vunpack.c.l.b16 %v2249
  %v2378 = vunpack.c.l.b16 %v2250
  %v2379 = vunpack.c.l.b16 %v2251
  %v2380 = vunpack.c.l.b16 %v2252
  %v2381 = vunpack.c.l.b16 %v2253
  %v2382 = vunpack.c.l.b16 %v2254
  %v2383 = vunpack.c.l.b16 %v2255
  %v2384 = vunpack.c.l.b16 %v2256
  %v2385 = vunpack.c.l.b16 %v2257
  %v2386 = vunpack.c.h.b16 %v2226
  %v2387 = vunpack.c.h.b16 %v2227
  %v2388 = vunpack.c.h.b16 %v2228
  %v2389 = vunpack.c.h.b16 %v2229
  %v2390 = vunpack.c.h.b16 %v2230
  %v2391 = vunpack.c.h.b16 %v2231
  %v2392 = vunpack.c.h.b16 %v2232
  %v2393 = vunpack.c.h.b16 %v2233
  %v2394 = vunpack.c.h.b16 %v2234
  %v2395 = vunpack.c.h.b16 %v2235
  %v2396 = vunpack.c.h.b16 %v2236
  %v2397 = vunpack.c.h.b16 %v2237
  %v2398 = vunpack.c.h.b16 %v2238
  %v2399 = vunpack.c.h.b16 %v2239
  %v2400 = vunpack.c.h.b16 %v2240
  %v2401 = vunpack.c.h.b16 %v2241
  %v2402 = vunpack.c.h.b16 %v2242
  %v2403 = vunpack.c.h.b16 %v2243
  %v2404 = vunpack.c.h.b16 %v2244
  %v2405 = vunpack.c.h.b16 %v2245
  %v2406 = vunpack.c.h.b16 %v2246
  %v2407 = vunpack.c.h.b16 %v2247
  %v2408 = vunpack.c.h.b16 %v2248
  %v2409 = vunpack.c.h.b16 %v2249
  %v2410 = vunpack.c.h.b16 %v2250
  %v2411 = vunpack.c.h.b16 %v2251
  %v2412 = vunpack.c.h.b16 %v2252
  %v2413 = vunpack.c.h.b16 %v2253
  %v2414 = vunpack.c.h.b16 %v2254
  %v2415 = vunpack.c.h.b16 %v2255
  %v2416 = vunpack.c.h.b16 %v2256
  %v2417 = vunpack.c.h.b16 %v2257
  %v2418 = vunpack.c.l.b16 %v2258
  %v2419 = vunpack.c.l.b16 %v2259
  %v2420 = vunpack.c.l.b16 %v2260
  %v2421 = vunpack.c.l.b16 %v2261
  %v2422 = vunpack.c.l.b16 %v2262
  %v2423 = vunpack.c.l.b16 %v2263
  %v2424 = vunpack.c.l.b16 %v2264
  %v2425 = vunpack.c.l.b16 %v2265
  %v2426 = vunpack.c.l.b16 %v2266
  %v2427 = vunpack.c.l.b16 %v2267
  %v2428 = vunpack.c.l.b16 %v2268
  %v2429 = vunpack.c.l.b16 %v2269
  %v2430 = vunpack.c.l.b16 %v2270
  %v2431 = vunpack.c.l.b16 %v2271
  %v2432 = vunpack.c.l.b16 %v2272
  %v2433 = vunpack.c.l.b16 %v2273
  %v2434 = vunpack.c.l.b16 %v2274
  %v2435 = vunpack.c.l.b16 %v2275
  %v2436 = vunpack.c.l.b16 %v2276
  %v2437 = vunpack.c.l.b16 %v2277
  %v2438 = vunpack.c.l.b16 %v2278
  %v2439 = vunpack.c.l.b16 %v2279
  %v2440 = vunpack.c.l.b16 %v2280
  %v2441 = vunpack.c.l.b16 %v2281
  %v2442 = vunpack.c.l.b16 %v2282
  %v2443 = vunpack.c.l.b16 %v2283
  %v2444 = vunpack.c.l.b16 %v2284
  %v2445 = vunpack.c.l.b16 %v2285
  %v2446 = vunpack.c.l.b16 %v2286
  %v2447 = vunpack.c.l.b16 %v2287
  %v2448 = vunpack.c.l.b16 %v2288
  %v2449 = vunpack.c.l.b16 %v2289
  %v2450 = vunpack.c.h.b16 %v2258
  %v2451 = vunpack.c.h.b16 %v2259
  %v2452 = vunpack.c.h.b16 %v2260
  %v2453 = vunpack.c.h.b16 %v2261
  %v2454 = vunpack.c.h.b16 %v2262
  %v2455 = vunpack.c.h.b16 %v2263
  %v2456 = vunpack.c.h.b16 %v2264
  %v2457 = vunpack.c.h.b16 %v2265
  %v2458 = vunpack.c.h.b16 %v2266
  %v2459 = vunpack.c.h.b16 %v2267
  %v2460 = vunpack.c.h.b16 %v2268
  %v2461 = vunpack.c.h.b16 %v2269
  %v2462 = vunpack.c.h.b16 %v2270
  %v2463 = vunpack.c.h.b16 %v2271
  %v2464 = vunpack.c.h.b16 %v2272
  %v2465 = vunpack.c.h.b16 %v2273
  %v2466 = vunpack.c.h.b16 %v2274
  %v2467 = vunpack.c.h.b16 %v2275
  %v2468 = vunpack.c.h.b16 %v2276
  %v2469 = vunpack.c.h.b16 %v2277
  %v2470 = vunpack.c.h.b16 %v2278
  %v2471 = vunpack.c.h.b16 %v2279
  %v2472 = vunpack.c.h.b16 %v2280
  %v2473 = vunpack.c.h.b16 %v2281
  %v2474 = vunpack.c.h.b16 %v2282
  %v2475 = vunpack.c.h.b16 %v2283
  %v2476 = vunpack.c.h.b16 %v2284
  %v2477 = vunpack.c.h.b16 %v2285
  %v2478 = vunpack.c.h.b16 %v2286
  %v2479 = vunpack.c.h.b16 %v2287
  %v2480 = vunpack.c.h.b16 %v2288
  %v2481 = vunpack.c.h.b16 %v2289
  %v2482 = vpack.c.b16 %v2355, %v2354
  %v2483 = vpack.c.b16 %v2357, %v2356
  %v2484 = vpack.c.b16 %v2359, %v2358
  %v2485 = vpack.c.b16 %v2361, %v2360
  %v2486 = vpack.c.b16 %v2363, %v2362
  %v2487 = vpack.c.b16 %v2365, %v2364
  %v2488 = vpack.c.b16 %v2367, %v2366
  %v2489 = vpack.c.b16 %v2369, %v2368
  %v2490 = vpack.c.b16 %v2371, %v2370
  %v2491 = vpack.c.b16 %v2373, %v2372
  %v2492 = vpack.c.b16 %v2375, %v2374
  %v2493 = vpack.c.b16 %v2377, %v2376
  %v2494 = vpack.c.b16 %v2379, %v2378
  %v2495 = vpack.c.b16 %v2381, %v2380
  %v2496 = vpack.c.b16 %v2383, %v2382
  %v2497 = vpack.c.b16 %v2385, %v2384
  %v2498 = vpack.c.b16 %v2387, %v2386
  %v2499 = vpack.c.b16 %v2389, %v2388
  %v2500 = vpack.c.b16 %v2391, %v2390
  %v2501 = vpack.c.b16 %v2393, %v2392
  %v2502 = vpack.c.b16 %v2395, %v2394
  %v2503 = vpack.c.b16 %v2397, %v2396
  %v2504 = vpack.c.b16 %v2399, %v2398
  %v2505 = vpack.c.b16 %v2401, %v2400
  %v2506 = vpack.c.b16 %v2403, %v2402
  %v2507 = vpack.c.b16 %v2405, %v2404
  %v2508 = vpack.c.b16 %v2407, %v2406
  %v2509 = vpack.c.b16 %v2409, %v2408
  %v2510 = vpack.c.b16 %v2411, %v2410
  %v2511 = vpack.c.b16 %v2413, %v2412
  %v2512 = vpack.c.b16 %v2415, %v2414
  %v2513 = vpack.c.b16 %v2417, %v2416
  %v2514 = vpack.c.b16 %v2419, %v2418
  %v2515 = vpack.c.b16 %v2421, %v2420
  %v2516 = vpack.c.b16 %v2423, %v2422
  %v2517 = vpack.c.b16 %v2425, %v2424
  %v2518 = vpack.c.b16 %v2427, %v2426
  %v2519 = vpack.c.b16 %v2429, %v2428
  %v2520 = vpack.c.b16 %v2431, %v2430
  %v2521 = vpack.c.b16 %v2433, %v2432
  %v2522 = vpack.c.b16 %v2435, %v2434
  %v2523 = vpack.c.b16 %v2437, %v2436
  %v2524 = vpack.c.b16 %v2439, %v2438
  %v2525 = vpack.c.b16 %v2441, %v2440
  %v2526 = vpack.c.b16 %v2443, %v2442
  %v2527 = vpack.c.b16 %v2445, %v2444
  %v2528 = vpack.c.b16 %v2447, %v2446
  %v2529 = vpack.c.b16 %v2449, %v2448
  %v2530 = vpack.c.b16 %v2451, %v2450
  %v2531 = vpack.c.b16 %v2453, %v2452
  %v2532 = vpack.c.b16 %v2455, %v2454
  %v2533 = vpack.c.b16 %v2457, %v2456
  %v2534 = vpack.c.b16 %v2459, %v2458
  %v2535 = vpack.c.b16 %v2461, %v2460
  %v2536 = vpack.c.b16 %v2463, %v2462
  %v2537 = vpack.c.b16 %v2465, %v2464
  %v2538 = vpack.c.b16 %v2467, %v2466
  %v2539 = vpack.c.b16 %v2469, %v2468
  %v2540 = vpack.c.b16 %v2471, %v2470
  %v2541 = vpack.c.b16 %v2473, %v2472
  %v2542 = vpack.c.b16 %v2475, %v2474
  %v2543 = vpack.c.b16 %v2477, %v2476
  %v2544 = vpack.c.b16 %v2479, %v2478
  %v2545 = vpack.c.b16 %v2481, %v2480
  %2610 = vst [vmem:[%s2] sm:$0xff] %v2482
  %2611 = vst [vmem:[%s2 + $0x8] sm:$0xff] %v2483
  %2612 = vst [vmem:[%s2 + $0x10] sm:$0xff] %v2484
  %2613 = vst [vmem:[%s2 + $0x18] sm:$0xff] %v2485
  %2614 = vst [vmem:[%s2 + $0x20] sm:$0xff] %v2486
  %2615 = vst [vmem:[%s2 + $0x28] sm:$0xff] %v2487
  %2616 = vst [vmem:[%s2 + $0x30] sm:$0xff] %v2488
  %2617 = vst [vmem:[%s2 + $0x38] sm:$0xff] %v2489
  %2618 = vst [vmem:[%s2 + $0x40] sm:$0xff] %v2490
  %2619 = vst [vmem:[%s2 + $0x48] sm:$0xff] %v2491
  %2620 = vst [vmem:[%s2 + $0x50] sm:$0xff] %v2492
  %2621 = vst [vmem:[%s2 + $0x58] sm:$0xff] %v2493
  %2622 = vst [vmem:[%s2 + $0x60] sm:$0xff] %v2494
  %2623 = vst [vmem:[%s2 + $0x68] sm:$0xff] %v2495
  %2624 = vst [vmem:[%s2 + $0x70] sm:$0xff] %v2496
  %2625 = vst [vmem:[%s2 + $0x78] sm:$0xff] %v2497
  %2626 = vst [vmem:[%s2 + $0x80] sm:$0xff] %v2498
  %2627 = vst [vmem:[%s2 + $0x88] sm:$0xff] %v2499
  %2628 = vst [vmem:[%s2 + $0x90] sm:$0xff] %v2500
  %2629 = vst [vmem:[%s2 + $0x98] sm:$0xff] %v2501
  %2630 = vst [vmem:[%s2 + $0xa0] sm:$0xff] %v2502
  %2631 = vst [vmem:[%s2 + $0xa8] sm:$0xff] %v2503
  %2632 = vst [vmem:[%s2 + $0xb0] sm:$0xff] %v2504
  %2633 = vst [vmem:[%s2 + $0xb8] sm:$0xff] %v2505
  %2634 = vst [vmem:[%s2 + $0xc0] sm:$0xff] %v2506
  %2635 = vst [vmem:[%s2 + $0xc8] sm:$0xff] %v2507
  %2636 = vst [vmem:[%s2 + $0xd0] sm:$0xff] %v2508
  %2637 = vst [vmem:[%s2 + $0xd8] sm:$0xff] %v2509
  %2638 = vst [vmem:[%s2 + $0xe0] sm:$0xff] %v2510
  %2639 = vst [vmem:[%s2 + $0xe8] sm:$0xff] %v2511
  %2640 = vst [vmem:[%s2 + $0xf0] sm:$0xff] %v2512
  %2641 = vst [vmem:[%s2 + $0xf8] sm:$0xff] %v2513
  %2642 = vst [vmem:[%s2 + $0x100] sm:$0xff] %v2514
  %2643 = vst [vmem:[%s2 + $0x108] sm:$0xff] %v2515
  %2644 = vst [vmem:[%s2 + $0x110] sm:$0xff] %v2516
  %2645 = vst [vmem:[%s2 + $0x118] sm:$0xff] %v2517
  %2646 = vst [vmem:[%s2 + $0x120] sm:$0xff] %v2518
  %2647 = vst [vmem:[%s2 + $0x128] sm:$0xff] %v2519
  %2648 = vst [vmem:[%s2 + $0x130] sm:$0xff] %v2520
  %2649 = vst [vmem:[%s2 + $0x138] sm:$0xff] %v2521
  %2650 = vst [vmem:[%s2 + $0x140] sm:$0xff] %v2522
  %2651 = vst [vmem:[%s2 + $0x148] sm:$0xff] %v2523
  %2652 = vst [vmem:[%s2 + $0x150] sm:$0xff] %v2524
  %2653 = vst [vmem:[%s2 + $0x158] sm:$0xff] %v2525
  %2654 = vst [vmem:[%s2 + $0x160] sm:$0xff] %v2526
  %2655 = vst [vmem:[%s2 + $0x168] sm:$0xff] %v2527
  %2656 = vst [vmem:[%s2 + $0x170] sm:$0xff] %v2528
  %2657 = vst [vmem:[%s2 + $0x178] sm:$0xff] %v2529
  %2658 = vst [vmem:[%s2 + $0x180] sm:$0xff] %v2530
  %2659 = vst [vmem:[%s2 + $0x188] sm:$0xff] %v2531
  %2660 = vst [vmem:[%s2 + $0x190] sm:$0xff] %v2532
  %2661 = vst [vmem:[%s2 + $0x198] sm:$0xff] %v2533
  %2662 = vst [vmem:[%s2 + $0x1a0] sm:$0xff] %v2534
  %2663 = vst [vmem:[%s2 + $0x1a8] sm:$0xff] %v2535
  %2664 = vst [vmem:[%s2 + $0x1b0] sm:$0xff] %v2536
  %2665 = vst [vmem:[%s2 + $0x1b8] sm:$0xff] %v2537
  %2666 = vst [vmem:[%s2 + $0x1c0] sm:$0xff] %v2538
  %2667 = vst [vmem:[%s2 + $0x1c8] sm:$0xff] %v2539
  %2668 = vst [vmem:[%s2 + $0x1d0] sm:$0xff] %v2540
  %2669 = vst [vmem:[%s2 + $0x1d8] sm:$0xff] %v2541
  %2670 = vst [vmem:[%s2 + $0x1e0] sm:$0xff] %v2542
  %2671 = vst [vmem:[%s2 + $0x1e8] sm:$0xff] %v2543
  %2672 = vst [vmem:[%s2 + $0x1f0] sm:$0xff] %v2544
  %2673 = vst [vmem:[%s2 + $0x1f8] sm:$0xff] %v2545
  // Predicated region
  $region10: #{pvp_forward.3} parent=0 // pred_check
    _
  $region11: #{pvp_forward.3} parent=0 // pred_check_branch
    %2675 = sbr.rel (0) target = $region13
  $region12: #{pvp_forward.3} parent=0 // pred_region
    _
  $region13: #{pvp_forward.3} parent=0 // pred_fallthru
    _
  // Predicated region
  $region14: #{pvp_forward.3} parent=0 // pred_check
    _
  $region15: #{pvp_forward.3} parent=0 // pred_check_branch
    %2677 = sbr.rel (0) target = $region17
  $region16: #{pvp_forward.3} parent=0 // pred_region
    _
  $region17: #{pvp_forward.3} parent=0 // pred_fallthru
    _

</llo_original>
